<compile_context>
chip_gen: v7x
topology: tpu7x:2x2x1
jax: 0.10.0
libtpu: 0.0.40
codegen_flags: <defaults>
</compile_context>

<pallas_src>
import functools

import jax
import jax.numpy as jnp
from jax.experimental import pallas as pl
from jax.experimental.pallas import tpu as pltpu

EPS = 1e-5        # nn.LayerNorm default
NEG_INF = -1e30   # additive mask value for cross-(head,batch) attention


# ----------------------------------------------------------------------------
# Fused kernel: embed + all transformer layers, single invocation (no grid).
# ----------------------------------------------------------------------------
def fused_encoder_kernel(x_ref, pos_ref, win_ref, bin_ref, bias_ref,
                         wqkv_ref, wfc_ref, bfc_ref,
                         ln1w_ref, ln1b_ref,
                         w1_ref, b1_ref, w2_ref, b2_ref,
                         ln2w_ref, ln2b_ref,
                         o_ref,
                         *, num_layers, heads, head_dim, embed_size, tokens):
    x = x_ref[...]                                                   # (NT, C)
    # input feature linear (pre-transposed weight) + position embedding
    h = (jnp.dot(x, win_ref[...], preferred_element_type=jnp.float32)
         + bin_ref[...] + pos_ref[...])                              # (NT, E)

    scale = 1.0 / jnp.sqrt(jnp.float32(embed_size))  # PyTorch: / sqrt(embed_size)
    bias = bias_ref[...]                             # (heads*NT, heads*NT)

    def layer_norm(v, w, b):
        mu = jnp.mean(v, axis=-1, keepdims=True)
        var = jnp.mean((v - mu) ** 2, axis=-1, keepdims=True)
        return (v - mu) * jax.lax.rsqrt(var + EPS) * w + b

    hd = head_dim
    for l in range(num_layers):                                      # static unroll (L small)
        # ---- head/batch-stacked layout: rows ordered (head, batch, token) ----
        h_s = jnp.concatenate(
            [h[:, i * hd:(i + 1) * hd] for i in range(heads)], axis=0)  # (heads*NT, hd)

        # ---- fused Q/K/V: one (heads*NT, hd) @ (hd, 3*hd) matmul ----
        qkv = jnp.dot(h_s, wqkv_ref[l], preferred_element_type=jnp.float32)
        q = qkv[:, :hd]
        k = qkv[:, hd:2 * hd]
        v = qkv[:, 2 * hd:]

        # ---- all heads & batches in one score matmul, block-diag softmax ----
        s = jnp.einsum("qd,kd->qk", q, k,
                       preferred_element_type=jnp.float32) * scale + bias
        s = s - jnp.max(s, axis=-1, keepdims=True)                   # stable softmax
        p = jnp.exp(s)
        p = p * pl.reciprocal(jnp.sum(p, axis=-1, keepdims=True), approx=True)
        o_s = jnp.dot(p, v, preferred_element_type=jnp.float32)      # (heads*NT, hd)

        # ---- regroup heads back into lanes: (NT, E) ----
        concat = jnp.concatenate(
            [o_s[i * tokens:(i + 1) * tokens, :] for i in range(heads)], axis=1)

        attn = (jnp.dot(concat, wfc_ref[l], preferred_element_type=jnp.float32)
                + bfc_ref[l])

        # ---- residual + LayerNorm 1 ----
        x1 = layer_norm(attn + h, ln1w_ref[l], ln1b_ref[l])

        # ---- feed-forward ----
        ff = jnp.dot(x1, w1_ref[l], preferred_element_type=jnp.float32) + b1_ref[l]
        ff = jnp.maximum(ff, 0.0)
        ff = jnp.dot(ff, w2_ref[l], preferred_element_type=jnp.float32) + b2_ref[l]

        # ---- residual + LayerNorm 2 ----
        h = layer_norm(ff + x1, ln2w_ref[l], ln2b_ref[l])

    o_ref[...] = h                                                   # single (NT, E) slab store


# ----------------------------------------------------------------------------
# Wrapper: fold batch, stack / pre-transpose weights, single pallas_call
# ----------------------------------------------------------------------------
def encoder_forward(x, params, *, heads):
    N, T, C = x.shape
    E = params["w_in"].shape[0]
    layers = params["layers"]
    L = len(layers)
    hd = E // heads
    NT = N * T

    x_flat = x.reshape(NT, C)                        # fold batch into rows (outside kernel)
    pos = jnp.tile(params["pos_emb"][:T], (N, 1))    # (NT, E), matches flattened (n, t) order

    # Block-diagonal additive mask: attention stays within each (head, batch)
    # group of T rows (rows in the kernel are ordered (head, batch, token)).
    r = jnp.arange(heads * NT)
    bias = jnp.where((r[:, None] // T) == (r[None, :] // T),
                     0.0, NEG_INF).astype(jnp.float32)

    # Per-layer weights stacked along L and pre-transposed for `x @ W` form.
    # Shared per-head (hd, hd) Q/K/V weights fused into one (hd, 3*hd) matrix.
    wqkv = jnp.stack([jnp.concatenate([lp["wq"].T, lp["wk"].T, lp["wv"].T], axis=1)
                      for lp in layers])             # (L, hd, 3*hd)
    wfc = jnp.stack([lp["wfc"].T for lp in layers])  # (L, E, E)
    bfc = jnp.stack([lp["bfc"] for lp in layers])    # (L, 1, E)
    ln1w = jnp.stack([lp["ln1w"] for lp in layers])
    ln1b = jnp.stack([lp["ln1b"] for lp in layers])
    w1 = jnp.stack([lp["w1"].T for lp in layers])    # (L, E, F)
    b1 = jnp.stack([lp["b1"] for lp in layers])      # (L, 1, F)
    w2 = jnp.stack([lp["w2"].T for lp in layers])    # (L, F, E)
    b2 = jnp.stack([lp["b2"] for lp in layers])      # (L, 1, E)
    ln2w = jnp.stack([lp["ln2w"] for lp in layers])
    ln2b = jnp.stack([lp["ln2b"] for lp in layers])

    kernel = functools.partial(fused_encoder_kernel, num_layers=L, heads=heads,
                               head_dim=hd, embed_size=E, tokens=NT)

    out_flat = pl.pallas_call(
        kernel,
        out_shape=jax.ShapeDtypeStruct((NT, E), jnp.float32),
        # No grid: one folded step; everything (weights + activations) is
        # VMEM-resident.  Explicit VMEM limit (well above actual use, below
        # every generation's physical VMEM).
        compiler_params=pltpu.CompilerParams(vmem_limit_bytes=32 * 1024 * 1024),
    )(x_flat, pos, params["w_in"].T, params["b_in"], bias,
      wqkv, wfc, bfc, ln1w, ln1b, w1, b1, w2, b2, ln2w, ln2b)

    return out_flat.reshape(N, T, E)


# ----------------------------------------------------------------------------
# Pure-JAX reference for correctness check (mirrors the PyTorch math exactly)
# ----------------------------------------------------------------------------
def encoder_reference(x, params, heads):
    N, T, _ = x.shape
    E = params["w_in"].shape[0]
    hd = E // heads
    out = x @ params["w_in"].T + params["b_in"] + params["pos_emb"][:T]
    for p in params["layers"]:
        xq = out
        r = out.reshape(N, T, heads, hd)
        q = r @ p["wq"].T
        k = r @ p["wk"].T
        v = r @ p["wv"].T
        energy = jnp.einsum("nqhd,nkhd->nhqk", q, k) / jnp.sqrt(jnp.float32(E))
        attn = jax.nn.softmax(energy, axis=3)
        o = jnp.einsum("nhql,nlhd->nqhd", attn, v).reshape(N, T, E)
        o = o @ p["wfc"].T + p["bfc"]

        def ln(h, w, b):
            mu = jnp.mean(h, axis=-1, keepdims=True)
            var = jnp.mean((h - mu) ** 2, axis=-1, keepdims=True)
            return (h - mu) * jax.lax.rsqrt(var + EPS) * w + b

        x1 = ln(o + xq, p["ln1w"], p["ln1b"])
        ff = jnp.maximum(x1 @ p["w1"].T + p["b1"], 0.0) @ p["w2"].T + p["b2"]
        out = ln(ff + x1, p["ln2w"], p["ln2b"])
    return out


# ----------------------------------------------------------------------------
# Deterministic parameter init (shapes from the module __init__)
# ----------------------------------------------------------------------------
def init_params(key, src_feature_dim, embed_size, num_layers, heads,
                forward_expansion, max_length):
    hd = embed_size // heads
    F = forward_expansion * embed_size
    keys = jax.random.split(key, 2 + num_layers)

    def lin(k, out_dim, in_dim):
        return jax.random.normal(k, (out_dim, in_dim), jnp.float32) * 0.05

    params = {
        "w_in": lin(keys[0], embed_size, src_feature_dim),
        "b_in": jnp.zeros((1, embed_size), jnp.float32),
        "pos_emb": jax.random.normal(keys[1], (max_length, embed_size),
                                     jnp.float32) * 0.05,
        "layers": [],
    }
    for i in range(num_layers):
        lk = jax.random.split(keys[2 + i], 6)
        params["layers"].append({
            "wq": lin(lk[0], hd, hd),
            "wk": lin(lk[1], hd, hd),
            "wv": lin(lk[2], hd, hd),
            "wfc": lin(lk[3], embed_size, embed_size),
            "bfc": jnp.zeros((1, embed_size), jnp.float32),
            "ln1w": jnp.ones((1, embed_size), jnp.float32),
            "ln1b": jnp.zeros((1, embed_size), jnp.float32),
            "w1": lin(lk[4], F, embed_size),
            "b1": jnp.zeros((1, F), jnp.float32),
            "w2": lin(lk[5], embed_size, F),
            "b2": jnp.zeros((1, embed_size), jnp.float32),
            "ln2w": jnp.ones((1, embed_size), jnp.float32),
            "ln2b": jnp.zeros((1, embed_size), jnp.float32),
        })
    return params


if __name__ == "__main__":
    # Small shapes consistent with the module: batch=2, seq=8, src_feature=12,
    # embed=32, heads=4, layers=2, forward_expansion=4, max_length=16.
    N, T, C = 2, 8, 12
    embed_size, num_layers, heads = 32, 2, 4
    forward_expansion, max_length = 4, 16

    key = jax.random.PRNGKey(0)
    kx, kp = jax.random.split(key)
    x = jax.random.normal(kx, (N, T, C), jnp.float32)
    params = init_params(kp, C, embed_size, num_layers, heads,
                         forward_expansion, max_length)

    fwd = jax.jit(encoder_forward, static_argnames="heads")
    out = fwd(x, params, heads=heads)            # mask=None path
    out = jax.block_until_ready(out)

    ref = encoder_reference(x, params, heads)
    assert out.shape == (N, T, embed_size)
    assert jnp.allclose(out, ref, atol=1e-2, rtol=1e-2), "mismatch vs reference"

    print("KERNEL_OK")
</pallas_src>

<mosaic_0001>
module attributes {stable_mosaic.version = 11 : i64} {
  func.func @fused_encoder_kernel(%arg0: memref<16x12xf32, #tpu.memory_space<vmem>>, %arg1: memref<16x32xf32, #tpu.memory_space<vmem>>, %arg2: memref<12x32xf32, #tpu.memory_space<vmem>>, %arg3: memref<1x32xf32, #tpu.memory_space<vmem>>, %arg4: memref<64x64xf32, #tpu.memory_space<vmem>>, %arg5: memref<2x8x24xf32, #tpu.memory_space<vmem>>, %arg6: memref<2x32x32xf32, #tpu.memory_space<vmem>>, %arg7: memref<2x1x32xf32, #tpu.memory_space<vmem>>, %arg8: memref<2x1x32xf32, #tpu.memory_space<vmem>>, %arg9: memref<2x1x32xf32, #tpu.memory_space<vmem>>, %arg10: memref<2x32x128xf32, #tpu.memory_space<vmem>>, %arg11: memref<2x1x128xf32, #tpu.memory_space<vmem>>, %arg12: memref<2x128x32xf32, #tpu.memory_space<vmem>>, %arg13: memref<2x1x32xf32, #tpu.memory_space<vmem>>, %arg14: memref<2x1x32xf32, #tpu.memory_space<vmem>>, %arg15: memref<2x1x32xf32, #tpu.memory_space<vmem>>, %arg16: memref<16x32xf32, #tpu.memory_space<vmem>>) attributes {dimension_semantics = [], scalar_prefetch = 0 : i64, scratch_operands = 0 : i64, tpu.core_type = #tpu.core_type<tc>} {
    %c0 = arith.constant 0 : index
    %c0_0 = arith.constant 0 : index
    %0 = vector.load %arg0[%c0, %c0_0] : memref<16x12xf32, #tpu.memory_space<vmem>>, vector<16x12xf32>
    %c0_1 = arith.constant 0 : index
    %c0_2 = arith.constant 0 : index
    %1 = vector.load %arg2[%c0_1, %c0_2] : memref<12x32xf32, #tpu.memory_space<vmem>>, vector<12x32xf32>
    %cst = arith.constant dense<0.000000e+00> : vector<16x32xf32>
    %2 = tpu.matmul %0, %1, %cst {dimension_numbers = #tpu.dot_dimension_numbers<[1], [0], [0], [1], [0, 0, 1, 1], [], []>} : vector<16x12xf32>, vector<12x32xf32>, vector<16x32xf32> -> vector<16x32xf32>
    %c0_3 = arith.constant 0 : index
    %c0_4 = arith.constant 0 : index
    %3 = vector.load %arg3[%c0_3, %c0_4] : memref<1x32xf32, #tpu.memory_space<vmem>>, vector<1x32xf32>
    %4 = vector.broadcast %3 : vector<1x32xf32> to vector<16x32xf32>
    %5 = arith.addf %2, %4 : vector<16x32xf32>
    %c0_5 = arith.constant 0 : index
    %c0_6 = arith.constant 0 : index
    %6 = vector.load %arg1[%c0_5, %c0_6] : memref<16x32xf32, #tpu.memory_space<vmem>>, vector<16x32xf32>
    %7 = arith.addf %5, %6 : vector<16x32xf32>
    %cst_7 = arith.constant 3.200000e+01 : f32
    %8 = math.sqrt %cst_7 : f32
    %cst_8 = arith.constant 1.000000e+00 : f32
    %9 = arith.divf %cst_8, %8 : f32
    %c0_9 = arith.constant 0 : index
    %c0_10 = arith.constant 0 : index
    %10 = vector.load %arg4[%c0_9, %c0_10] : memref<64x64xf32, #tpu.memory_space<vmem>>, vector<64x64xf32>
    %11 = vector.extract_strided_slice %7 {offsets = [0, 0], sizes = [16, 8], strides = [1, 1]} : vector<16x32xf32> to vector<16x8xf32>
    %12 = vector.extract_strided_slice %7 {offsets = [0, 8], sizes = [16, 8], strides = [1, 1]} : vector<16x32xf32> to vector<16x8xf32>
    %13 = vector.extract_strided_slice %7 {offsets = [0, 16], sizes = [16, 8], strides = [1, 1]} : vector<16x32xf32> to vector<16x8xf32>
    %14 = vector.extract_strided_slice %7 {offsets = [0, 24], sizes = [16, 8], strides = [1, 1]} : vector<16x32xf32> to vector<16x8xf32>
    %15 = tpu.concatenate %11, %12, %13, %14 in 0 : vector<16x8xf32>, vector<16x8xf32>, vector<16x8xf32>, vector<16x8xf32> -> vector<64x8xf32>
    %c0_11 = arith.constant 0 : index
    %c0_12 = arith.constant 0 : index
    %c0_13 = arith.constant 0 : index
    %16 = vector.load %arg5[%c0_11, %c0_12, %c0_13] : memref<2x8x24xf32, #tpu.memory_space<vmem>>, vector<1x8x24xf32>
    %17 = vector.shape_cast %16 : vector<1x8x24xf32> to vector<8x24xf32>
    %cst_14 = arith.constant dense<0.000000e+00> : vector<64x24xf32>
    %18 = tpu.matmul %15, %17, %cst_14 {dimension_numbers = #tpu.dot_dimension_numbers<[1], [0], [0], [1], [0, 0, 1, 1], [], []>} : vector<64x8xf32>, vector<8x24xf32>, vector<64x24xf32> -> vector<64x24xf32>
    %19 = vector.extract_strided_slice %18 {offsets = [0, 0], sizes = [64, 8], strides = [1, 1]} : vector<64x24xf32> to vector<64x8xf32>
    %20 = vector.extract_strided_slice %18 {offsets = [0, 8], sizes = [64, 8], strides = [1, 1]} : vector<64x24xf32> to vector<64x8xf32>
    %21 = vector.extract_strided_slice %18 {offsets = [0, 16], sizes = [64, 8], strides = [1, 1]} : vector<64x24xf32> to vector<64x8xf32>
    "tpu.trace_start"() <{level = 10 : i32, message = "qd,kd->qk"}> : () -> ()
    %cst_15 = arith.constant dense<0.000000e+00> : vector<64x64xf32>
    %22 = tpu.matmul %19, %20, %cst_15 {dimension_numbers = #tpu.dot_dimension_numbers<[1], [1], [0], [0], [0, 0, 1, 0], [], []>} : vector<64x8xf32>, vector<64x8xf32>, vector<64x64xf32> -> vector<64x64xf32>
    "tpu.trace_stop"() : () -> ()
    %23 = vector.broadcast %9 : f32 to vector<64x64xf32>
    %24 = arith.mulf %22, %23 : vector<64x64xf32>
    %25 = arith.addf %24, %10 : vector<64x64xf32>
    %cst_16 = arith.constant dense<0xFF800000> : vector<64xf32>
    %26 = vector.multi_reduction <maximumf>, %25, %cst_16 [1] : vector<64x64xf32> to vector<64xf32>
    %27 = vector.shape_cast %26 : vector<64xf32> to vector<64x1xf32>
    %28 = vector.broadcast %27 : vector<64x1xf32> to vector<64x64xf32>
    %29 = arith.subf %25, %28 : vector<64x64xf32>
    %30 = math.exp %29 : vector<64x64xf32>
    %cst_17 = arith.constant dense<0.000000e+00> : vector<64xf32>
    %31 = vector.multi_reduction <add>, %30, %cst_17 [1] : vector<64x64xf32> to vector<64xf32>
    %32 = vector.shape_cast %31 : vector<64xf32> to vector<64x1xf32>
    %33 = tpu.reciprocal %32 {approx = true} : vector<64x1xf32> -> vector<64x1xf32>
    %34 = vector.broadcast %33 : vector<64x1xf32> to vector<64x64xf32>
    %35 = arith.mulf %30, %34 : vector<64x64xf32>
    %cst_18 = arith.constant dense<0.000000e+00> : vector<64x8xf32>
    %36 = tpu.matmul %35, %21, %cst_18 {dimension_numbers = #tpu.dot_dimension_numbers<[1], [0], [0], [1], [0, 0, 1, 1], [], []>} : vector<64x64xf32>, vector<64x8xf32>, vector<64x8xf32> -> vector<64x8xf32>
    %37 = vector.extract_strided_slice %36 {offsets = [0, 0], sizes = [16, 8], strides = [1, 1]} : vector<64x8xf32> to vector<16x8xf32>
    %38 = vector.extract_strided_slice %36 {offsets = [16, 0], sizes = [16, 8], strides = [1, 1]} : vector<64x8xf32> to vector<16x8xf32>
    %39 = vector.extract_strided_slice %36 {offsets = [32, 0], sizes = [16, 8], strides = [1, 1]} : vector<64x8xf32> to vector<16x8xf32>
    %40 = vector.extract_strided_slice %36 {offsets = [48, 0], sizes = [16, 8], strides = [1, 1]} : vector<64x8xf32> to vector<16x8xf32>
    %41 = tpu.concatenate %37, %38, %39, %40 in 1 : vector<16x8xf32>, vector<16x8xf32>, vector<16x8xf32>, vector<16x8xf32> -> vector<16x32xf32>
    %c0_19 = arith.constant 0 : index
    %c0_20 = arith.constant 0 : index
    %c0_21 = arith.constant 0 : index
    %42 = vector.load %arg6[%c0_19, %c0_20, %c0_21] : memref<2x32x32xf32, #tpu.memory_space<vmem>>, vector<1x32x32xf32>
    %43 = vector.shape_cast %42 : vector<1x32x32xf32> to vector<32x32xf32>
    %cst_22 = arith.constant dense<0.000000e+00> : vector<16x32xf32>
    %44 = tpu.matmul %41, %43, %cst_22 {dimension_numbers = #tpu.dot_dimension_numbers<[1], [0], [0], [1], [0, 0, 1, 1], [], []>} : vector<16x32xf32>, vector<32x32xf32>, vector<16x32xf32> -> vector<16x32xf32>
    %c0_23 = arith.constant 0 : index
    %c0_24 = arith.constant 0 : index
    %c0_25 = arith.constant 0 : index
    %45 = vector.load %arg7[%c0_23, %c0_24, %c0_25] : memref<2x1x32xf32, #tpu.memory_space<vmem>>, vector<1x1x32xf32>
    %46 = vector.shape_cast %45 : vector<1x1x32xf32> to vector<1x32xf32>
    %47 = vector.broadcast %46 : vector<1x32xf32> to vector<16x32xf32>
    %48 = arith.addf %44, %47 : vector<16x32xf32>
    %49 = arith.addf %48, %7 : vector<16x32xf32>
    %c0_26 = arith.constant 0 : index
    %c0_27 = arith.constant 0 : index
    %c0_28 = arith.constant 0 : index
    %50 = vector.load %arg8[%c0_26, %c0_27, %c0_28] : memref<2x1x32xf32, #tpu.memory_space<vmem>>, vector<1x1x32xf32>
    %51 = vector.shape_cast %50 : vector<1x1x32xf32> to vector<1x32xf32>
    %c0_29 = arith.constant 0 : index
    %c0_30 = arith.constant 0 : index
    %c0_31 = arith.constant 0 : index
    %52 = vector.load %arg9[%c0_29, %c0_30, %c0_31] : memref<2x1x32xf32, #tpu.memory_space<vmem>>, vector<1x1x32xf32>
    %53 = vector.shape_cast %52 : vector<1x1x32xf32> to vector<1x32xf32>
    %cst_32 = arith.constant dense<0.000000e+00> : vector<16xf32>
    %54 = vector.multi_reduction <add>, %49, %cst_32 [1] : vector<16x32xf32> to vector<16xf32>
    %55 = vector.shape_cast %54 : vector<16xf32> to vector<16x1xf32>
    %cst_33 = arith.constant 3.200000e+01 : f32
    %56 = vector.broadcast %cst_33 : f32 to vector<16x1xf32>
    %57 = arith.divf %55, %56 : vector<16x1xf32>
    %58 = vector.broadcast %57 : vector<16x1xf32> to vector<16x32xf32>
    %59 = arith.subf %49, %58 : vector<16x32xf32>
    %60 = arith.mulf %59, %59 : vector<16x32xf32>
    %cst_34 = arith.constant dense<0.000000e+00> : vector<16xf32>
    %61 = vector.multi_reduction <add>, %60, %cst_34 [1] : vector<16x32xf32> to vector<16xf32>
    %62 = vector.shape_cast %61 : vector<16xf32> to vector<16x1xf32>
    %cst_35 = arith.constant 3.200000e+01 : f32
    %63 = vector.broadcast %cst_35 : f32 to vector<16x1xf32>
    %64 = arith.divf %62, %63 : vector<16x1xf32>
    %65 = vector.broadcast %57 : vector<16x1xf32> to vector<16x32xf32>
    %66 = arith.subf %49, %65 : vector<16x32xf32>
    %cst_36 = arith.constant 9.99999974E-6 : f32
    %67 = vector.broadcast %cst_36 : f32 to vector<16x1xf32>
    %68 = arith.addf %64, %67 : vector<16x1xf32>
    %69 = math.rsqrt %68 : vector<16x1xf32>
    %70 = vector.broadcast %69 : vector<16x1xf32> to vector<16x32xf32>
    %71 = arith.mulf %66, %70 : vector<16x32xf32>
    %72 = vector.broadcast %51 : vector<1x32xf32> to vector<16x32xf32>
    %73 = arith.mulf %71, %72 : vector<16x32xf32>
    %74 = vector.broadcast %53 : vector<1x32xf32> to vector<16x32xf32>
    %75 = arith.addf %73, %74 : vector<16x32xf32>
    %c0_37 = arith.constant 0 : index
    %c0_38 = arith.constant 0 : index
    %c0_39 = arith.constant 0 : index
    %76 = vector.load %arg10[%c0_37, %c0_38, %c0_39] : memref<2x32x128xf32, #tpu.memory_space<vmem>>, vector<1x32x128xf32>
    %77 = vector.shape_cast %76 : vector<1x32x128xf32> to vector<32x128xf32>
    %cst_40 = arith.constant dense<0.000000e+00> : vector<16x128xf32>
    %78 = tpu.matmul %75, %77, %cst_40 {dimension_numbers = #tpu.dot_dimension_numbers<[1], [0], [0], [1], [0, 0, 1, 1], [], []>} : vector<16x32xf32>, vector<32x128xf32>, vector<16x128xf32> -> vector<16x128xf32>
    %c0_41 = arith.constant 0 : index
    %c0_42 = arith.constant 0 : index
    %c0_43 = arith.constant 0 : index
    %79 = vector.load %arg11[%c0_41, %c0_42, %c0_43] : memref<2x1x128xf32, #tpu.memory_space<vmem>>, vector<1x1x128xf32>
    %80 = vector.shape_cast %79 : vector<1x1x128xf32> to vector<1x128xf32>
    %81 = vector.broadcast %80 : vector<1x128xf32> to vector<16x128xf32>
    %82 = arith.addf %78, %81 : vector<16x128xf32>
    %cst_44 = arith.constant 0.000000e+00 : f32
    %83 = vector.broadcast %cst_44 : f32 to vector<16x128xf32>
    %84 = arith.maximumf %82, %83 : vector<16x128xf32>
    %c0_45 = arith.constant 0 : index
    %c0_46 = arith.constant 0 : index
    %c0_47 = arith.constant 0 : index
    %85 = vector.load %arg12[%c0_45, %c0_46, %c0_47] : memref<2x128x32xf32, #tpu.memory_space<vmem>>, vector<1x128x32xf32>
    %86 = vector.shape_cast %85 : vector<1x128x32xf32> to vector<128x32xf32>
    %cst_48 = arith.constant dense<0.000000e+00> : vector<16x32xf32>
    %87 = tpu.matmul %84, %86, %cst_48 {dimension_numbers = #tpu.dot_dimension_numbers<[1], [0], [0], [1], [0, 0, 1, 1], [], []>} : vector<16x128xf32>, vector<128x32xf32>, vector<16x32xf32> -> vector<16x32xf32>
    %c0_49 = arith.constant 0 : index
    %c0_50 = arith.constant 0 : index
    %c0_51 = arith.constant 0 : index
    %88 = vector.load %arg13[%c0_49, %c0_50, %c0_51] : memref<2x1x32xf32, #tpu.memory_space<vmem>>, vector<1x1x32xf32>
    %89 = vector.shape_cast %88 : vector<1x1x32xf32> to vector<1x32xf32>
    %90 = vector.broadcast %89 : vector<1x32xf32> to vector<16x32xf32>
    %91 = arith.addf %87, %90 : vector<16x32xf32>
    %92 = arith.addf %91, %75 : vector<16x32xf32>
    %c0_52 = arith.constant 0 : index
    %c0_53 = arith.constant 0 : index
    %c0_54 = arith.constant 0 : index
    %93 = vector.load %arg14[%c0_52, %c0_53, %c0_54] : memref<2x1x32xf32, #tpu.memory_space<vmem>>, vector<1x1x32xf32>
    %94 = vector.shape_cast %93 : vector<1x1x32xf32> to vector<1x32xf32>
    %c0_55 = arith.constant 0 : index
    %c0_56 = arith.constant 0 : index
    %c0_57 = arith.constant 0 : index
    %95 = vector.load %arg15[%c0_55, %c0_56, %c0_57] : memref<2x1x32xf32, #tpu.memory_space<vmem>>, vector<1x1x32xf32>
    %96 = vector.shape_cast %95 : vector<1x1x32xf32> to vector<1x32xf32>
    %cst_58 = arith.constant dense<0.000000e+00> : vector<16xf32>
    %97 = vector.multi_reduction <add>, %92, %cst_58 [1] : vector<16x32xf32> to vector<16xf32>
    %98 = vector.shape_cast %97 : vector<16xf32> to vector<16x1xf32>
    %cst_59 = arith.constant 3.200000e+01 : f32
    %99 = vector.broadcast %cst_59 : f32 to vector<16x1xf32>
    %100 = arith.divf %98, %99 : vector<16x1xf32>
    %101 = vector.broadcast %100 : vector<16x1xf32> to vector<16x32xf32>
    %102 = arith.subf %92, %101 : vector<16x32xf32>
    %103 = arith.mulf %102, %102 : vector<16x32xf32>
    %cst_60 = arith.constant dense<0.000000e+00> : vector<16xf32>
    %104 = vector.multi_reduction <add>, %103, %cst_60 [1] : vector<16x32xf32> to vector<16xf32>
    %105 = vector.shape_cast %104 : vector<16xf32> to vector<16x1xf32>
    %cst_61 = arith.constant 3.200000e+01 : f32
    %106 = vector.broadcast %cst_61 : f32 to vector<16x1xf32>
    %107 = arith.divf %105, %106 : vector<16x1xf32>
    %108 = vector.broadcast %100 : vector<16x1xf32> to vector<16x32xf32>
    %109 = arith.subf %92, %108 : vector<16x32xf32>
    %cst_62 = arith.constant 9.99999974E-6 : f32
    %110 = vector.broadcast %cst_62 : f32 to vector<16x1xf32>
    %111 = arith.addf %107, %110 : vector<16x1xf32>
    %112 = math.rsqrt %111 : vector<16x1xf32>
    %113 = vector.broadcast %112 : vector<16x1xf32> to vector<16x32xf32>
    %114 = arith.mulf %109, %113 : vector<16x32xf32>
    %115 = vector.broadcast %94 : vector<1x32xf32> to vector<16x32xf32>
    %116 = arith.mulf %114, %115 : vector<16x32xf32>
    %117 = vector.broadcast %96 : vector<1x32xf32> to vector<16x32xf32>
    %118 = arith.addf %116, %117 : vector<16x32xf32>
    %119 = vector.extract_strided_slice %118 {offsets = [0, 0], sizes = [16, 8], strides = [1, 1]} : vector<16x32xf32> to vector<16x8xf32>
    %120 = vector.extract_strided_slice %118 {offsets = [0, 8], sizes = [16, 8], strides = [1, 1]} : vector<16x32xf32> to vector<16x8xf32>
    %121 = vector.extract_strided_slice %118 {offsets = [0, 16], sizes = [16, 8], strides = [1, 1]} : vector<16x32xf32> to vector<16x8xf32>
    %122 = vector.extract_strided_slice %118 {offsets = [0, 24], sizes = [16, 8], strides = [1, 1]} : vector<16x32xf32> to vector<16x8xf32>
    %123 = tpu.concatenate %119, %120, %121, %122 in 0 : vector<16x8xf32>, vector<16x8xf32>, vector<16x8xf32>, vector<16x8xf32> -> vector<64x8xf32>
    %c1 = arith.constant 1 : index
    %c0_63 = arith.constant 0 : index
    %c0_64 = arith.constant 0 : index
    %124 = vector.load %arg5[%c1, %c0_63, %c0_64] : memref<2x8x24xf32, #tpu.memory_space<vmem>>, vector<1x8x24xf32>
    %125 = vector.shape_cast %124 : vector<1x8x24xf32> to vector<8x24xf32>
    %cst_65 = arith.constant dense<0.000000e+00> : vector<64x24xf32>
    %126 = tpu.matmul %123, %125, %cst_65 {dimension_numbers = #tpu.dot_dimension_numbers<[1], [0], [0], [1], [0, 0, 1, 1], [], []>} : vector<64x8xf32>, vector<8x24xf32>, vector<64x24xf32> -> vector<64x24xf32>
    %127 = vector.extract_strided_slice %126 {offsets = [0, 0], sizes = [64, 8], strides = [1, 1]} : vector<64x24xf32> to vector<64x8xf32>
    %128 = vector.extract_strided_slice %126 {offsets = [0, 8], sizes = [64, 8], strides = [1, 1]} : vector<64x24xf32> to vector<64x8xf32>
    %129 = vector.extract_strided_slice %126 {offsets = [0, 16], sizes = [64, 8], strides = [1, 1]} : vector<64x24xf32> to vector<64x8xf32>
    "tpu.trace_start"() <{level = 10 : i32, message = "qd,kd->qk"}> : () -> ()
    %cst_66 = arith.constant dense<0.000000e+00> : vector<64x64xf32>
    %130 = tpu.matmul %127, %128, %cst_66 {dimension_numbers = #tpu.dot_dimension_numbers<[1], [1], [0], [0], [0, 0, 1, 0], [], []>} : vector<64x8xf32>, vector<64x8xf32>, vector<64x64xf32> -> vector<64x64xf32>
    "tpu.trace_stop"() : () -> ()
    %131 = vector.broadcast %9 : f32 to vector<64x64xf32>
    %132 = arith.mulf %130, %131 : vector<64x64xf32>
    %133 = arith.addf %132, %10 : vector<64x64xf32>
    %cst_67 = arith.constant dense<0xFF800000> : vector<64xf32>
    %134 = vector.multi_reduction <maximumf>, %133, %cst_67 [1] : vector<64x64xf32> to vector<64xf32>
    %135 = vector.shape_cast %134 : vector<64xf32> to vector<64x1xf32>
    %136 = vector.broadcast %135 : vector<64x1xf32> to vector<64x64xf32>
    %137 = arith.subf %133, %136 : vector<64x64xf32>
    %138 = math.exp %137 : vector<64x64xf32>
    %cst_68 = arith.constant dense<0.000000e+00> : vector<64xf32>
    %139 = vector.multi_reduction <add>, %138, %cst_68 [1] : vector<64x64xf32> to vector<64xf32>
    %140 = vector.shape_cast %139 : vector<64xf32> to vector<64x1xf32>
    %141 = tpu.reciprocal %140 {approx = true} : vector<64x1xf32> -> vector<64x1xf32>
    %142 = vector.broadcast %141 : vector<64x1xf32> to vector<64x64xf32>
    %143 = arith.mulf %138, %142 : vector<64x64xf32>
    %cst_69 = arith.constant dense<0.000000e+00> : vector<64x8xf32>
    %144 = tpu.matmul %143, %129, %cst_69 {dimension_numbers = #tpu.dot_dimension_numbers<[1], [0], [0], [1], [0, 0, 1, 1], [], []>} : vector<64x64xf32>, vector<64x8xf32>, vector<64x8xf32> -> vector<64x8xf32>
    %145 = vector.extract_strided_slice %144 {offsets = [0, 0], sizes = [16, 8], strides = [1, 1]} : vector<64x8xf32> to vector<16x8xf32>
    %146 = vector.extract_strided_slice %144 {offsets = [16, 0], sizes = [16, 8], strides = [1, 1]} : vector<64x8xf32> to vector<16x8xf32>
    %147 = vector.extract_strided_slice %144 {offsets = [32, 0], sizes = [16, 8], strides = [1, 1]} : vector<64x8xf32> to vector<16x8xf32>
    %148 = vector.extract_strided_slice %144 {offsets = [48, 0], sizes = [16, 8], strides = [1, 1]} : vector<64x8xf32> to vector<16x8xf32>
    %149 = tpu.concatenate %145, %146, %147, %148 in 1 : vector<16x8xf32>, vector<16x8xf32>, vector<16x8xf32>, vector<16x8xf32> -> vector<16x32xf32>
    %c1_70 = arith.constant 1 : index
    %c0_71 = arith.constant 0 : index
    %c0_72 = arith.constant 0 : index
    %150 = vector.load %arg6[%c1_70, %c0_71, %c0_72] : memref<2x32x32xf32, #tpu.memory_space<vmem>>, vector<1x32x32xf32>
    %151 = vector.shape_cast %150 : vector<1x32x32xf32> to vector<32x32xf32>
    %cst_73 = arith.constant dense<0.000000e+00> : vector<16x32xf32>
    %152 = tpu.matmul %149, %151, %cst_73 {dimension_numbers = #tpu.dot_dimension_numbers<[1], [0], [0], [1], [0, 0, 1, 1], [], []>} : vector<16x32xf32>, vector<32x32xf32>, vector<16x32xf32> -> vector<16x32xf32>
    %c1_74 = arith.constant 1 : index
    %c0_75 = arith.constant 0 : index
    %c0_76 = arith.constant 0 : index
    %153 = vector.load %arg7[%c1_74, %c0_75, %c0_76] : memref<2x1x32xf32, #tpu.memory_space<vmem>>, vector<1x1x32xf32>
    %154 = vector.shape_cast %153 : vector<1x1x32xf32> to vector<1x32xf32>
    %155 = vector.broadcast %154 : vector<1x32xf32> to vector<16x32xf32>
    %156 = arith.addf %152, %155 : vector<16x32xf32>
    %157 = arith.addf %156, %118 : vector<16x32xf32>
    %c1_77 = arith.constant 1 : index
    %c0_78 = arith.constant 0 : index
    %c0_79 = arith.constant 0 : index
    %158 = vector.load %arg8[%c1_77, %c0_78, %c0_79] : memref<2x1x32xf32, #tpu.memory_space<vmem>>, vector<1x1x32xf32>
    %159 = vector.shape_cast %158 : vector<1x1x32xf32> to vector<1x32xf32>
    %c1_80 = arith.constant 1 : index
    %c0_81 = arith.constant 0 : index
    %c0_82 = arith.constant 0 : index
    %160 = vector.load %arg9[%c1_80, %c0_81, %c0_82] : memref<2x1x32xf32, #tpu.memory_space<vmem>>, vector<1x1x32xf32>
    %161 = vector.shape_cast %160 : vector<1x1x32xf32> to vector<1x32xf32>
    %cst_83 = arith.constant dense<0.000000e+00> : vector<16xf32>
    %162 = vector.multi_reduction <add>, %157, %cst_83 [1] : vector<16x32xf32> to vector<16xf32>
    %163 = vector.shape_cast %162 : vector<16xf32> to vector<16x1xf32>
    %cst_84 = arith.constant 3.200000e+01 : f32
    %164 = vector.broadcast %cst_84 : f32 to vector<16x1xf32>
    %165 = arith.divf %163, %164 : vector<16x1xf32>
    %166 = vector.broadcast %165 : vector<16x1xf32> to vector<16x32xf32>
    %167 = arith.subf %157, %166 : vector<16x32xf32>
    %168 = arith.mulf %167, %167 : vector<16x32xf32>
    %cst_85 = arith.constant dense<0.000000e+00> : vector<16xf32>
    %169 = vector.multi_reduction <add>, %168, %cst_85 [1] : vector<16x32xf32> to vector<16xf32>
    %170 = vector.shape_cast %169 : vector<16xf32> to vector<16x1xf32>
    %cst_86 = arith.constant 3.200000e+01 : f32
    %171 = vector.broadcast %cst_86 : f32 to vector<16x1xf32>
    %172 = arith.divf %170, %171 : vector<16x1xf32>
    %173 = vector.broadcast %165 : vector<16x1xf32> to vector<16x32xf32>
    %174 = arith.subf %157, %173 : vector<16x32xf32>
    %cst_87 = arith.constant 9.99999974E-6 : f32
    %175 = vector.broadcast %cst_87 : f32 to vector<16x1xf32>
    %176 = arith.addf %172, %175 : vector<16x1xf32>
    %177 = math.rsqrt %176 : vector<16x1xf32>
    %178 = vector.broadcast %177 : vector<16x1xf32> to vector<16x32xf32>
    %179 = arith.mulf %174, %178 : vector<16x32xf32>
    %180 = vector.broadcast %159 : vector<1x32xf32> to vector<16x32xf32>
    %181 = arith.mulf %179, %180 : vector<16x32xf32>
    %182 = vector.broadcast %161 : vector<1x32xf32> to vector<16x32xf32>
    %183 = arith.addf %181, %182 : vector<16x32xf32>
    %c1_88 = arith.constant 1 : index
    %c0_89 = arith.constant 0 : index
    %c0_90 = arith.constant 0 : index
    %184 = vector.load %arg10[%c1_88, %c0_89, %c0_90] : memref<2x32x128xf32, #tpu.memory_space<vmem>>, vector<1x32x128xf32>
    %185 = vector.shape_cast %184 : vector<1x32x128xf32> to vector<32x128xf32>
    %cst_91 = arith.constant dense<0.000000e+00> : vector<16x128xf32>
    %186 = tpu.matmul %183, %185, %cst_91 {dimension_numbers = #tpu.dot_dimension_numbers<[1], [0], [0], [1], [0, 0, 1, 1], [], []>} : vector<16x32xf32>, vector<32x128xf32>, vector<16x128xf32> -> vector<16x128xf32>
    %c1_92 = arith.constant 1 : index
    %c0_93 = arith.constant 0 : index
    %c0_94 = arith.constant 0 : index
    %187 = vector.load %arg11[%c1_92, %c0_93, %c0_94] : memref<2x1x128xf32, #tpu.memory_space<vmem>>, vector<1x1x128xf32>
    %188 = vector.shape_cast %187 : vector<1x1x128xf32> to vector<1x128xf32>
    %189 = vector.broadcast %188 : vector<1x128xf32> to vector<16x128xf32>
    %190 = arith.addf %186, %189 : vector<16x128xf32>
    %cst_95 = arith.constant 0.000000e+00 : f32
    %191 = vector.broadcast %cst_95 : f32 to vector<16x128xf32>
    %192 = arith.maximumf %190, %191 : vector<16x128xf32>
    %c1_96 = arith.constant 1 : index
    %c0_97 = arith.constant 0 : index
    %c0_98 = arith.constant 0 : index
    %193 = vector.load %arg12[%c1_96, %c0_97, %c0_98] : memref<2x128x32xf32, #tpu.memory_space<vmem>>, vector<1x128x32xf32>
    %194 = vector.shape_cast %193 : vector<1x128x32xf32> to vector<128x32xf32>
    %cst_99 = arith.constant dense<0.000000e+00> : vector<16x32xf32>
    %195 = tpu.matmul %192, %194, %cst_99 {dimension_numbers = #tpu.dot_dimension_numbers<[1], [0], [0], [1], [0, 0, 1, 1], [], []>} : vector<16x128xf32>, vector<128x32xf32>, vector<16x32xf32> -> vector<16x32xf32>
    %c1_100 = arith.constant 1 : index
    %c0_101 = arith.constant 0 : index
    %c0_102 = arith.constant 0 : index
    %196 = vector.load %arg13[%c1_100, %c0_101, %c0_102] : memref<2x1x32xf32, #tpu.memory_space<vmem>>, vector<1x1x32xf32>
    %197 = vector.shape_cast %196 : vector<1x1x32xf32> to vector<1x32xf32>
    %198 = vector.broadcast %197 : vector<1x32xf32> to vector<16x32xf32>
    %199 = arith.addf %195, %198 : vector<16x32xf32>
    %200 = arith.addf %199, %183 : vector<16x32xf32>
    %c1_103 = arith.constant 1 : index
    %c0_104 = arith.constant 0 : index
    %c0_105 = arith.constant 0 : index
    %201 = vector.load %arg14[%c1_103, %c0_104, %c0_105] : memref<2x1x32xf32, #tpu.memory_space<vmem>>, vector<1x1x32xf32>
    %202 = vector.shape_cast %201 : vector<1x1x32xf32> to vector<1x32xf32>
    %c1_106 = arith.constant 1 : index
    %c0_107 = arith.constant 0 : index
    %c0_108 = arith.constant 0 : index
    %203 = vector.load %arg15[%c1_106, %c0_107, %c0_108] : memref<2x1x32xf32, #tpu.memory_space<vmem>>, vector<1x1x32xf32>
    %204 = vector.shape_cast %203 : vector<1x1x32xf32> to vector<1x32xf32>
    %cst_109 = arith.constant dense<0.000000e+00> : vector<16xf32>
    %205 = vector.multi_reduction <add>, %200, %cst_109 [1] : vector<16x32xf32> to vector<16xf32>
    %206 = vector.shape_cast %205 : vector<16xf32> to vector<16x1xf32>
    %cst_110 = arith.constant 3.200000e+01 : f32
    %207 = vector.broadcast %cst_110 : f32 to vector<16x1xf32>
    %208 = arith.divf %206, %207 : vector<16x1xf32>
    %209 = vector.broadcast %208 : vector<16x1xf32> to vector<16x32xf32>
    %210 = arith.subf %200, %209 : vector<16x32xf32>
    %211 = arith.mulf %210, %210 : vector<16x32xf32>
    %cst_111 = arith.constant dense<0.000000e+00> : vector<16xf32>
    %212 = vector.multi_reduction <add>, %211, %cst_111 [1] : vector<16x32xf32> to vector<16xf32>
    %213 = vector.shape_cast %212 : vector<16xf32> to vector<16x1xf32>
    %cst_112 = arith.constant 3.200000e+01 : f32
    %214 = vector.broadcast %cst_112 : f32 to vector<16x1xf32>
    %215 = arith.divf %213, %214 : vector<16x1xf32>
    %216 = vector.broadcast %208 : vector<16x1xf32> to vector<16x32xf32>
    %217 = arith.subf %200, %216 : vector<16x32xf32>
    %cst_113 = arith.constant 9.99999974E-6 : f32
    %218 = vector.broadcast %cst_113 : f32 to vector<16x1xf32>
    %219 = arith.addf %215, %218 : vector<16x1xf32>
    %220 = math.rsqrt %219 : vector<16x1xf32>
    %221 = vector.broadcast %220 : vector<16x1xf32> to vector<16x32xf32>
    %222 = arith.mulf %217, %221 : vector<16x32xf32>
    %223 = vector.broadcast %202 : vector<1x32xf32> to vector<16x32xf32>
    %224 = arith.mulf %222, %223 : vector<16x32xf32>
    %225 = vector.broadcast %204 : vector<1x32xf32> to vector<16x32xf32>
    %226 = arith.addf %224, %225 : vector<16x32xf32>
    %c0_114 = arith.constant 0 : index
    %c0_115 = arith.constant 0 : index
    %227 = vector.load %arg16[%c0_114, %c0_115] : memref<16x32xf32, #tpu.memory_space<vmem>>, vector<16x32xf32>
    tpu.vector_store %arg16[%c0_114, %c0_115], %226 {strides = array<i32>} : memref<16x32xf32, #tpu.memory_space<vmem>>, vector<16x32xf32>,
    return
  }
}

</mosaic_0001>

<llo_original>
// kernel: encoder_forward.1
$region0: #{encoder_forward.1}
  #allocation0 [shape = 'u32[]', space=smem, size = 0x4, offset = 0x4, fixed_abs, tag = 'smem constant byte address 0x4 - core index']
  #allocation1 [shape = 'u32[144,128]{1,0:T(1,128)}', space=vmem, size = 0x12000, scoped, tag = 'internal scratch']
  %s0 = inlined_call_operand.vmem [shape: f32[16,12], index: 0, kind: input, shape index: {}]
  %s1 = inlined_call_operand.vmem [shape: f32[16,32], index: 1, kind: input, shape index: {}]
  %s2 = inlined_call_operand.vmem [shape: f32[12,32], index: 2, kind: input, shape index: {}]
  %s3 = inlined_call_operand.vmem [shape: f32[1,32], index: 3, kind: input, shape index: {}]
  %s4 = inlined_call_operand.vmem [shape: f32[64,64], index: 4, kind: input, shape index: {}]
  %s5 = inlined_call_operand.vmem [shape: f32[2,8,24], index: 5, kind: input, shape index: {}]
  %s6 = inlined_call_operand.vmem [shape: f32[2,32,32], index: 6, kind: input, shape index: {}]
  %s7 = inlined_call_operand.vmem [shape: f32[2,1,32], index: 7, kind: input, shape index: {}]
  %s8 = inlined_call_operand.vmem [shape: f32[2,1,32], index: 8, kind: input, shape index: {}]
  %s9 = inlined_call_operand.vmem [shape: f32[2,1,32], index: 9, kind: input, shape index: {}]
  %s10 = inlined_call_operand.vmem [shape: f32[2,32,128], index: 10, kind: input, shape index: {}]
  %s11 = inlined_call_operand.vmem [shape: f32[2,1,128], index: 11, kind: input, shape index: {}]
  %s12 = inlined_call_operand.vmem [shape: f32[2,128,32], index: 12, kind: input, shape index: {}]
  %s13 = inlined_call_operand.vmem [shape: f32[2,1,32], index: 13, kind: input, shape index: {}]
  %s14 = inlined_call_operand.vmem [shape: f32[2,1,32], index: 14, kind: input, shape index: {}]
  %s15 = inlined_call_operand.vmem [shape: f32[2,1,32], index: 15, kind: input, shape index: {}]
  %s16 = inlined_call_operand.hbm [shape: f32[16,32], index: 16, kind: output, shape index: {}]
  %s17 = sld [smem:[#allocation0]]
  $region74: #{encoder_forward.1} parent=0
    _
  %s19 = ssub.s32 1, %s17
  %s20 = scalar_select 0, %s19, %s17
  $region1: #{encoder_forward.1} parent=0
    #allocation2 [shape = 'u8[8192]{0}', space=vmem, size = 0x2000, scoped, tag = 'output window, operand 0, single buffered']
    #allocation3 [shape = 's32[1]{0}', space=sflag, size = 0x4, scoped, tag = 'scoped memory for encoder_forward.1']
    %21 = vsyncpa [#allocation3], 0
    // Predicated region
    $region2: #{encoder_forward.1} parent=1 // pred_check
      _
    $region3: #{encoder_forward.1} parent=1 // pred_check_branch
      %23 = sbr.rel (0) target = $region5
    $region4: #{encoder_forward.1} parent=1 // pred_region
      _
    $region5: #{encoder_forward.1} parent=1 // pred_fallthru
      _
    // Predicated region
    $region6: #{encoder_forward.1} parent=1 // pred_check
      _
    $region7: #{encoder_forward.1} parent=1 // pred_check_branch
      %25 = sbr.rel (0) target = $region9
    $region8: #{encoder_forward.1} parent=1 // pred_region
      _
    $region9: #{encoder_forward.1} parent=1 // pred_fallthru
      _
    // Predicated region
    $region10: #{encoder_forward.1} parent=1 // pred_check
      _
    $region11: #{encoder_forward.1} parent=1 // pred_check_branch
      %27 = sbr.rel (0) target = $region13
    $region12: #{encoder_forward.1} parent=1 // pred_region
      _
    $region13: #{encoder_forward.1} parent=1 // pred_fallthru
      _
    // Predicated region
    $region14: #{encoder_forward.1} parent=1 // pred_check
      _
    $region15: #{encoder_forward.1} parent=1 // pred_check_branch
      %29 = sbr.rel (0) target = $region17
    $region16: #{encoder_forward.1} parent=1 // pred_region
      _
    $region17: #{encoder_forward.1} parent=1 // pred_fallthru
      _
    // Predicated region
    $region18: #{encoder_forward.1} parent=1 // pred_check
      _
    $region19: #{encoder_forward.1} parent=1 // pred_check_branch
      %31 = sbr.rel (0) target = $region21
    $region20: #{encoder_forward.1} parent=1 // pred_region
      _
    $region21: #{encoder_forward.1} parent=1 // pred_fallthru
      _
    // Predicated region
    $region22: #{encoder_forward.1} parent=1 // pred_check
      _
    $region23: #{encoder_forward.1} parent=1 // pred_check_branch
      %33 = sbr.rel (0) target = $region25
    $region24: #{encoder_forward.1} parent=1 // pred_region
      _
    $region25: #{encoder_forward.1} parent=1 // pred_fallthru
      _
    // Predicated region
    $region26: #{encoder_forward.1} parent=1 // pred_check
      _
    $region27: #{encoder_forward.1} parent=1 // pred_check_branch
      %35 = sbr.rel (0) target = $region29
    $region28: #{encoder_forward.1} parent=1 // pred_region
      _
    $region29: #{encoder_forward.1} parent=1 // pred_fallthru
      _
    // Predicated region
    $region30: #{encoder_forward.1} parent=1 // pred_check
      _
    $region31: #{encoder_forward.1} parent=1 // pred_check_branch
      %37 = sbr.rel (0) target = $region33
    $region32: #{encoder_forward.1} parent=1 // pred_region
      _
    $region33: #{encoder_forward.1} parent=1 // pred_fallthru
      _
    // Predicated region
    $region34: #{encoder_forward.1} parent=1 // pred_check
      _
    $region35: #{encoder_forward.1} parent=1 // pred_check_branch
      %39 = sbr.rel (0) target = $region37
    $region36: #{encoder_forward.1} parent=1 // pred_region
      _
    $region37: #{encoder_forward.1} parent=1 // pred_fallthru
      _
    // Predicated region
    $region38: #{encoder_forward.1} parent=1 // pred_check
      _
    $region39: #{encoder_forward.1} parent=1 // pred_check_branch
      %41 = sbr.rel (0) target = $region41
    $region40: #{encoder_forward.1} parent=1 // pred_region
      _
    $region41: #{encoder_forward.1} parent=1 // pred_fallthru
      _
    // Predicated region
    $region42: #{encoder_forward.1} parent=1 // pred_check
      _
    $region43: #{encoder_forward.1} parent=1 // pred_check_branch
      %43 = sbr.rel (0) target = $region45
    $region44: #{encoder_forward.1} parent=1 // pred_region
      _
    $region45: #{encoder_forward.1} parent=1 // pred_fallthru
      _
    // Predicated region
    $region46: #{encoder_forward.1} parent=1 // pred_check
      _
    $region47: #{encoder_forward.1} parent=1 // pred_check_branch
      %45 = sbr.rel (0) target = $region49
    $region48: #{encoder_forward.1} parent=1 // pred_region
      _
    $region49: #{encoder_forward.1} parent=1 // pred_fallthru
      _
    // Predicated region
    $region50: #{encoder_forward.1} parent=1 // pred_check
      _
    $region51: #{encoder_forward.1} parent=1 // pred_check_branch
      %47 = sbr.rel (0) target = $region53
    $region52: #{encoder_forward.1} parent=1 // pred_region
      _
    $region53: #{encoder_forward.1} parent=1 // pred_fallthru
      _
    // Predicated region
    $region54: #{encoder_forward.1} parent=1 // pred_check
      _
    $region55: #{encoder_forward.1} parent=1 // pred_check_branch
      %49 = sbr.rel (0) target = $region57
    $region56: #{encoder_forward.1} parent=1 // pred_region
      _
    $region57: #{encoder_forward.1} parent=1 // pred_fallthru
      _
    // Predicated region
    $region58: #{encoder_forward.1} parent=1 // pred_check
      _
    $region59: #{encoder_forward.1} parent=1 // pred_check_branch
      %51 = sbr.rel (0) target = $region61
    $region60: #{encoder_forward.1} parent=1 // pred_region
      _
    $region61: #{encoder_forward.1} parent=1 // pred_fallthru
      _
    // Predicated region
    $region62: #{encoder_forward.1} parent=1 // pred_check
      _
    $region63: #{encoder_forward.1} parent=1 // pred_check_branch
      %53 = sbr.rel (0) target = $region65
    $region64: #{encoder_forward.1} parent=1 // pred_region
      _
    $region65: #{encoder_forward.1} parent=1 // pred_fallthru
      _
    %v54 = vld [vmem:[%s0] sm:$0xff]
    %v55 = vld [vmem:[%s0 + $0x8] sm:$0xff]
    %v56 = vld [vmem:[%s2] sm:$0xff]
    %v57 = vld [vmem:[%s2 + $0x8] sm:$0xf]
    %v58 = vld [vmem:[%s3] sm:$0x1]
    %v60 = vlaneseq
    %v61 = vshrl.u32 %v60, 7
    %v62 = vsub.s32 0, %v61
    %v63 = vrot.slane %v58, %v62
    %vm65 = vcmask 97280
    %v67 = vsel %vm65, %v54, 0
    %v70 = vsel %vm65, %v55, 0
    %vm72 = vcmask 1043456
    %v74 = vsel %vm72, %v57, 0
    %76 = vmatprep.subr.mxu0 0.0
    %77 = vmatpush1.msra.mxu0 %v56
    %78 = vmatprep.subr.mxu0 0.0
    %79 = vmatpush1.msra.mxu0 %v74
    %80 = vmatprep.subr.mxu0 0.0
    %81 = vmatpush1.msra.mxu0 0.0
    %82 = vmatprep.subr.mxu0 0.0
    %83 = vmatpush1.msra.mxu0 0.0
    %84 = vmatprep.subr.mxu0 0.0
    %85 = vmatpush1.msra.mxu0 0.0
    %86 = vmatprep.subr.mxu0 0.0
    %87 = vmatpush1.msra.mxu0 0.0
    %88 = vmatprep.subr.mxu0 0.0
    %89 = vmatpush1.msra.mxu0 0.0
    %90 = vmatprep.subr.mxu0 0.0
    %91 = vmatpush1.msra.mxu0 0.0
    %92 = vmatprep.subr.mxu0 0.0
    %93 = vmatpush1.msra.mxu0 0.0
    %94 = vmatprep.subr.mxu0 0.0
    %95 = vmatpush1.msra.mxu0 0.0
    %96 = vmatprep.subr.mxu0 0.0
    %97 = vmatpush1.msra.mxu0 0.0
    %98 = vmatprep.subr.mxu0 0.0
    %99 = vmatpush1.msra.mxu0 0.0
    %100 = vmatprep.subr.mxu0 0.0
    %101 = vmatpush1.msra.mxu0 0.0
    %102 = vmatprep.subr.mxu0 0.0
    %103 = vmatpush1.msra.mxu0 0.0
    %104 = vmatprep.subr.mxu0 0.0
    %105 = vmatpush1.msra.mxu0 0.0
    %106 = vmatprep.subr.mxu0 0.0
    %107 = vmatpush1.msra.mxu0 0.0
    %108 = vmatprep.subr.mxu0 0.0
    %109 = vmatpush1.msra.mxu0 0.0
    %110 = vmatprep.subr.mxu0 0.0
    %111 = vmatpush1.msra.mxu0 0.0
    %112 = vmatprep.subr.mxu0 0.0
    %113 = vmatpush1.msra.mxu0 0.0
    %114 = vmatprep.subr.mxu0 0.0
    %115 = vmatpush1.msra.mxu0 0.0
    %116 = vmatprep.subr.mxu0 0.0
    %117 = vmatpush1.msra.mxu0 0.0
    %118 = vmatprep.subr.mxu0 0.0
    %119 = vmatpush1.msra.mxu0 0.0
    %120 = vmatprep.subr.mxu0 0.0
    %121 = vmatpush1.msra.mxu0 0.0
    %122 = vmatprep.subr.mxu0 0.0
    %123 = vmatpush1.msra.mxu0 0.0
    %124 = vmatprep.subr.mxu0 0.0
    %125 = vmatpush1.msra.mxu0 0.0
    %126 = vmatprep.subr.mxu0 0.0
    %127 = vmatpush1.msra.mxu0 0.0
    %128 = vmatprep.subr.mxu0 0.0
    %129 = vmatpush1.msra.mxu0 0.0
    %130 = vmatprep.subr.mxu0 0.0
    %131 = vmatpush1.msra.mxu0 0.0
    %132 = vmatprep.subr.mxu0 0.0
    %133 = vmatpush1.msra.mxu0 0.0
    %134 = vmatprep.subr.mxu0 0.0
    %135 = vmatpush1.msra.mxu0 0.0
    %136 = vmatprep.subr.mxu0 0.0
    %137 = vmatpush1.msra.mxu0 0.0
    %138 = vmatprep.subr.mxu0 0.0
    %139 = vmatpush1.msra.mxu0 0.0
    %140 = vmatprep.mubr.f32.mxu0 0.0
    %141 = vmatmul.mubr.f32.gmra.mrb[0].mxu0 %v67
    %v142 = vpop.f32.mrb[0].mxu0
    %v143 = vadd.f32 %v63, %v142
    %v144 = vpop.f32.mrb[0].mxu0
    %145 = vmatprep.mubr.f32.mxu0 0.0
    %146 = vmatmul.mubr.f32.gmra.mrb[0].mxu0 %v70
    %v147 = vpop.f32.mrb[0].mxu0
    %v148 = vadd.f32 %v63, %v147
    %v149 = vpop.f32.mrb[0].mxu0
    %150 = vdwg.mxu0
    %v151 = vld [vmem:[%s1] sm:$0xff]
    %v152 = vld [vmem:[%s1 + $0x8] sm:$0xff]
    %v153 = vadd.f32 %v143, %v151
    %v154 = vadd.f32 %v148, %v152
    %v155 = vld [vmem:[%s4] sm:$0xff]
    %v156 = vld [vmem:[%s4 + $0x8] sm:$0xff]
    %v157 = vld [vmem:[%s4 + $0x10] sm:$0xff]
    %v158 = vld [vmem:[%s4 + $0x18] sm:$0xff]
    %v159 = vld [vmem:[%s4 + $0x20] sm:$0xff]
    %v160 = vld [vmem:[%s4 + $0x28] sm:$0xff]
    %v161 = vld [vmem:[%s4 + $0x30] sm:$0xff]
    %v162 = vld [vmem:[%s4 + $0x38] sm:$0xff]
    %165 = vrot.lane.b32.xlu0 %v153, 120
    %v166 = vpop.permute.xlu0 %165
    %167 = vrot.lane.b32.xlu0 %v154, 120
    %v168 = vpop.permute.xlu0 %167
    %169 = vrot.lane.b32.xlu0 %v153, 112
    %v170 = vpop.permute.xlu0 %169
    %171 = vrot.lane.b32.xlu0 %v154, 112
    %v172 = vpop.permute.xlu0 %171
    %173 = vrot.lane.b32.xlu0 %v153, 104
    %v174 = vpop.permute.xlu0 %173
    %175 = vrot.lane.b32.xlu0 %v154, 104
    %v176 = vpop.permute.xlu0 %175
    %v177 = vld [vmem:[%s5] sm:$0xff]
    %vm178 = vcmask 64512
    %v179 = vsel %vm178, %v153, 0
    %v181 = vsel %vm178, %v154, 0
    %v183 = vsel %vm178, %v166, 0
    %v185 = vsel %vm178, %v168, 0
    %v187 = vsel %vm178, %v170, 0
    %v189 = vsel %vm178, %v172, 0
    %v191 = vsel %vm178, %v174, 0
    %v193 = vsel %vm178, %v176, 0
    %195 = vmatprep.subr.mxu0 0.0
    %196 = vmatpush1.msra.mxu0 %v177
    %197 = vmatprep.subr.mxu0 0.0
    %198 = vmatpush1.msra.mxu0 0.0
    %199 = vmatprep.subr.mxu0 0.0
    %200 = vmatpush1.msra.mxu0 0.0
    %201 = vmatprep.subr.mxu0 0.0
    %202 = vmatpush1.msra.mxu0 0.0
    %203 = vmatprep.subr.mxu0 0.0
    %204 = vmatpush1.msra.mxu0 0.0
    %205 = vmatprep.subr.mxu0 0.0
    %206 = vmatpush1.msra.mxu0 0.0
    %207 = vmatprep.subr.mxu0 0.0
    %208 = vmatpush1.msra.mxu0 0.0
    %209 = vmatprep.subr.mxu0 0.0
    %210 = vmatpush1.msra.mxu0 0.0
    %211 = vmatprep.subr.mxu0 0.0
    %212 = vmatpush1.msra.mxu0 0.0
    %213 = vmatprep.subr.mxu0 0.0
    %214 = vmatpush1.msra.mxu0 0.0
    %215 = vmatprep.subr.mxu0 0.0
    %216 = vmatpush1.msra.mxu0 0.0
    %217 = vmatprep.subr.mxu0 0.0
    %218 = vmatpush1.msra.mxu0 0.0
    %219 = vmatprep.subr.mxu0 0.0
    %220 = vmatpush1.msra.mxu0 0.0
    %221 = vmatprep.subr.mxu0 0.0
    %222 = vmatpush1.msra.mxu0 0.0
    %223 = vmatprep.subr.mxu0 0.0
    %224 = vmatpush1.msra.mxu0 0.0
    %225 = vmatprep.subr.mxu0 0.0
    %226 = vmatpush1.msra.mxu0 0.0
    %227 = vmatprep.subr.mxu0 0.0
    %228 = vmatpush1.msra.mxu0 0.0
    %229 = vmatprep.subr.mxu0 0.0
    %230 = vmatpush1.msra.mxu0 0.0
    %231 = vmatprep.subr.mxu0 0.0
    %232 = vmatpush1.msra.mxu0 0.0
    %233 = vmatprep.subr.mxu0 0.0
    %234 = vmatpush1.msra.mxu0 0.0
    %235 = vmatprep.subr.mxu0 0.0
    %236 = vmatpush1.msra.mxu0 0.0
    %237 = vmatprep.subr.mxu0 0.0
    %238 = vmatpush1.msra.mxu0 0.0
    %239 = vmatprep.subr.mxu0 0.0
    %240 = vmatpush1.msra.mxu0 0.0
    %241 = vmatprep.subr.mxu0 0.0
    %242 = vmatpush1.msra.mxu0 0.0
    %243 = vmatprep.subr.mxu0 0.0
    %244 = vmatpush1.msra.mxu0 0.0
    %245 = vmatprep.subr.mxu0 0.0
    %246 = vmatpush1.msra.mxu0 0.0
    %247 = vmatprep.subr.mxu0 0.0
    %248 = vmatpush1.msra.mxu0 0.0
    %249 = vmatprep.subr.mxu0 0.0
    %250 = vmatpush1.msra.mxu0 0.0
    %251 = vmatprep.subr.mxu0 0.0
    %252 = vmatpush1.msra.mxu0 0.0
    %253 = vmatprep.subr.mxu0 0.0
    %254 = vmatpush1.msra.mxu0 0.0
    %255 = vmatprep.subr.mxu0 0.0
    %256 = vmatpush1.msra.mxu0 0.0
    %257 = vmatprep.subr.mxu0 0.0
    %258 = vmatpush1.msra.mxu0 0.0
    %259 = vmatprep.mubr.f32.mxu0 0.0
    %260 = vmatmul.mubr.f32.gmra.mrb[0].mxu0 %v179
    %v261 = vpop.f32.mrb[0].mxu0
    %v262 = vadd.f32 0.0, %v261
    %v263 = vpop.f32.mrb[0].mxu0
    %264 = vmatprep.mubr.f32.mxu0 0.0
    %265 = vmatmul.mubr.f32.gmra.mrb[0].mxu0 %v181
    %v266 = vpop.f32.mrb[0].mxu0
    %v267 = vadd.f32 0.0, %v266
    %v268 = vpop.f32.mrb[0].mxu0
    %269 = vmatprep.mubr.f32.mxu0 0.0
    %270 = vmatmul.mubr.f32.gmra.mrb[0].mxu0 %v183
    %v271 = vpop.f32.mrb[0].mxu0
    %v272 = vadd.f32 0.0, %v271
    %v273 = vpop.f32.mrb[0].mxu0
    %274 = vmatprep.mubr.f32.mxu0 0.0
    %275 = vmatmul.mubr.f32.gmra.mrb[0].mxu0 %v185
    %v276 = vpop.f32.mrb[0].mxu0
    %v277 = vadd.f32 0.0, %v276
    %v278 = vpop.f32.mrb[0].mxu0
    %279 = vmatprep.mubr.f32.mxu0 0.0
    %280 = vmatmul.mubr.f32.gmra.mrb[0].mxu0 %v187
    %v281 = vpop.f32.mrb[0].mxu0
    %v282 = vadd.f32 0.0, %v281
    %v283 = vpop.f32.mrb[0].mxu0
    %284 = vmatprep.mubr.f32.mxu0 0.0
    %285 = vmatmul.mubr.f32.gmra.mrb[0].mxu0 %v189
    %v286 = vpop.f32.mrb[0].mxu0
    %v287 = vadd.f32 0.0, %v286
    %v288 = vpop.f32.mrb[0].mxu0
    %289 = vmatprep.mubr.f32.mxu0 0.0
    %290 = vmatmul.mubr.f32.gmra.mrb[0].mxu0 %v191
    %v291 = vpop.f32.mrb[0].mxu0
    %v292 = vadd.f32 0.0, %v291
    %v293 = vpop.f32.mrb[0].mxu0
    %294 = vmatprep.mubr.f32.mxu0 0.0
    %295 = vmatmul.mubr.f32.gmra.mrb[0].mxu0 %v193
    %v296 = vpop.f32.mrb[0].mxu0
    %v297 = vadd.f32 0.0, %v296
    %v298 = vpop.f32.mrb[0].mxu0
    %299 = vdwg.mxu0
    %308 = vrot.lane.b32.xlu0 %v262, 120
    %v309 = vpop.permute.xlu0 %308
    %310 = vrot.lane.b32.xlu0 %v267, 120
    %v311 = vpop.permute.xlu0 %310
    %312 = vrot.lane.b32.xlu0 %v272, 120
    %v313 = vpop.permute.xlu0 %312
    %314 = vrot.lane.b32.xlu0 %v277, 120
    %v315 = vpop.permute.xlu0 %314
    %316 = vrot.lane.b32.xlu0 %v282, 120
    %v317 = vpop.permute.xlu0 %316
    %318 = vrot.lane.b32.xlu0 %v287, 120
    %v319 = vpop.permute.xlu0 %318
    %320 = vrot.lane.b32.xlu0 %v292, 120
    %v321 = vpop.permute.xlu0 %320
    %322 = vrot.lane.b32.xlu0 %v297, 120
    %v323 = vpop.permute.xlu0 %322
    %v324 = vsel %vm178, %v262, 0
    %v326 = vsel %vm178, %v267, 0
    %v328 = vsel %vm178, %v272, 0
    %v330 = vsel %vm178, %v277, 0
    %v332 = vsel %vm178, %v282, 0
    %v334 = vsel %vm178, %v287, 0
    %v336 = vsel %vm178, %v292, 0
    %v338 = vsel %vm178, %v297, 0
    %v340 = vsel %vm178, %v309, 0
    %v342 = vsel %vm178, %v311, 0
    %v344 = vsel %vm178, %v313, 0
    %v346 = vsel %vm178, %v315, 0
    %v348 = vsel %vm178, %v317, 0
    %v350 = vsel %vm178, %v319, 0
    %v352 = vsel %vm178, %v321, 0
    %v354 = vsel %vm178, %v323, 0
    %356 = vmatprep.subr.mxu0 0.0
    %357 = vmatpush1.xpose.msra.mxu0 %v340
    %358 = vmatprep.subr.mxu0 0.0
    %359 = vmatpush1.xpose.msra.mxu0 %v342
    %360 = vmatprep.subr.mxu0 0.0
    %361 = vmatpush1.xpose.msra.mxu0 %v344
    %362 = vmatprep.subr.mxu0 0.0
    %363 = vmatpush1.xpose.msra.mxu0 %v346
    %364 = vmatprep.subr.mxu0 0.0
    %365 = vmatpush1.xpose.msra.mxu0 %v348
    %366 = vmatprep.subr.mxu0 0.0
    %367 = vmatpush1.xpose.msra.mxu0 %v350
    %368 = vmatprep.subr.mxu0 0.0
    %369 = vmatpush1.xpose.msra.mxu0 %v352
    %370 = vmatprep.subr.mxu0 0.0
    %371 = vmatpush1.xpose.msra.mxu0 %v354
    %372 = vmatprep.subr.mxu0 0.0
    %373 = vmatpush1.xpose.msra.mxu0 0.0
    %374 = vmatprep.subr.mxu0 0.0
    %375 = vmatpush1.xpose.msra.mxu0 0.0
    %376 = vmatprep.subr.mxu0 0.0
    %377 = vmatpush1.xpose.msra.mxu0 0.0
    %378 = vmatprep.subr.mxu0 0.0
    %379 = vmatpush1.xpose.msra.mxu0 0.0
    %380 = vmatprep.subr.mxu0 0.0
    %381 = vmatpush1.xpose.msra.mxu0 0.0
    %382 = vmatprep.subr.mxu0 0.0
    %383 = vmatpush1.xpose.msra.mxu0 0.0
    %384 = vmatprep.subr.mxu0 0.0
    %385 = vmatpush1.xpose.msra.mxu0 0.0
    %386 = vmatprep.subr.mxu0 0.0
    %387 = vmatpush1.xpose.msra.mxu0 0.0
    %388 = vmatprep.subr.mxu0 0.0
    %389 = vmatpush1.xpose.msra.mxu0 0.0
    %390 = vmatprep.subr.mxu0 0.0
    %391 = vmatpush1.xpose.msra.mxu0 0.0
    %392 = vmatprep.subr.mxu0 0.0
    %393 = vmatpush1.xpose.msra.mxu0 0.0
    %394 = vmatprep.subr.mxu0 0.0
    %395 = vmatpush1.xpose.msra.mxu0 0.0
    %396 = vmatprep.subr.mxu0 0.0
    %397 = vmatpush1.xpose.msra.mxu0 0.0
    %398 = vmatprep.subr.mxu0 0.0
    %399 = vmatpush1.xpose.msra.mxu0 0.0
    %400 = vmatprep.subr.mxu0 0.0
    %401 = vmatpush1.xpose.msra.mxu0 0.0
    %402 = vmatprep.subr.mxu0 0.0
    %403 = vmatpush1.xpose.msra.mxu0 0.0
    %404 = vmatprep.subr.mxu0 0.0
    %405 = vmatpush1.xpose.msra.mxu0 0.0
    %406 = vmatprep.subr.mxu0 0.0
    %407 = vmatpush1.xpose.msra.mxu0 0.0
    %408 = vmatprep.subr.mxu0 0.0
    %409 = vmatpush1.xpose.msra.mxu0 0.0
    %410 = vmatprep.subr.mxu0 0.0
    %411 = vmatpush1.xpose.msra.mxu0 0.0
    %412 = vmatprep.subr.mxu0 0.0
    %413 = vmatpush1.xpose.msra.mxu0 0.0
    %414 = vmatprep.subr.mxu0 0.0
    %415 = vmatpush1.xpose.msra.mxu0 0.0
    %416 = vmatprep.subr.mxu0 0.0
    %417 = vmatpush1.xpose.msra.mxu0 0.0
    %418 = vmatprep.subr.mxu0 0.0
    %419 = vmatpush1.xpose.msra.mxu0 0.0
    %420 = vmatprep.mubr.f32.mxu0 0.0
    %421 = vmatmul.mubr.f32.gmra.mrb[0].mxu0 %v324
    %v422 = vpop.f32.mrb[0].mxu0
    %v423 = vadd.f32 0.0, %v422
    %v424 = vpop.f32.mrb[0].mxu0
    %425 = vmatprep.mubr.f32.mxu0 0.0
    %426 = vmatmul.mubr.f32.gmra.mrb[0].mxu0 %v326
    %v427 = vpop.f32.mrb[0].mxu0
    %v428 = vadd.f32 0.0, %v427
    %v429 = vpop.f32.mrb[0].mxu0
    %430 = vmatprep.mubr.f32.mxu0 0.0
    %431 = vmatmul.mubr.f32.gmra.mrb[0].mxu0 %v328
    %v432 = vpop.f32.mrb[0].mxu0
    %v433 = vadd.f32 0.0, %v432
    %v434 = vpop.f32.mrb[0].mxu0
    %435 = vmatprep.mubr.f32.mxu0 0.0
    %436 = vmatmul.mubr.f32.gmra.mrb[0].mxu0 %v330
    %v437 = vpop.f32.mrb[0].mxu0
    %v438 = vadd.f32 0.0, %v437
    %v439 = vpop.f32.mrb[0].mxu0
    %440 = vmatprep.mubr.f32.mxu0 0.0
    %441 = vmatmul.mubr.f32.gmra.mrb[0].mxu0 %v332
    %v442 = vpop.f32.mrb[0].mxu0
    %v443 = vadd.f32 0.0, %v442
    %v444 = vpop.f32.mrb[0].mxu0
    %445 = vmatprep.mubr.f32.mxu0 0.0
    %446 = vmatmul.mubr.f32.gmra.mrb[0].mxu0 %v334
    %v447 = vpop.f32.mrb[0].mxu0
    %v448 = vadd.f32 0.0, %v447
    %v449 = vpop.f32.mrb[0].mxu0
    %450 = vmatprep.mubr.f32.mxu0 0.0
    %451 = vmatmul.mubr.f32.gmra.mrb[0].mxu0 %v336
    %v452 = vpop.f32.mrb[0].mxu0
    %v453 = vadd.f32 0.0, %v452
    %v454 = vpop.f32.mrb[0].mxu0
    %455 = vmatprep.mubr.f32.mxu0 0.0
    %456 = vmatmul.mubr.f32.gmra.mrb[0].mxu0 %v338
    %v457 = vpop.f32.mrb[0].mxu0
    %v458 = vadd.f32 0.0, %v457
    %v459 = vpop.f32.mrb[0].mxu0
    %460 = vdwg.mxu0
    %v461 = vmul.f32 %v423, 0.17677669
    %v462 = vmul.f32 %v428, 0.17677669
    %v463 = vmul.f32 %v433, 0.17677669
    %v464 = vmul.f32 %v438, 0.17677669
    %v465 = vmul.f32 %v443, 0.17677669
    %v466 = vmul.f32 %v448, 0.17677669
    %v467 = vmul.f32 %v453, 0.17677669
    %v468 = vmul.f32 %v458, 0.17677669
    %v469 = vadd.f32 %v461, %v155
    %v470 = vadd.f32 %v462, %v156
    %v471 = vadd.f32 %v463, %v157
    %v472 = vadd.f32 %v464, %v158
    %v473 = vadd.f32 %v465, %v159
    %v474 = vadd.f32 %v466, %v160
    %v475 = vadd.f32 %v467, %v161
    %v476 = vadd.f32 %v468, %v162
    %vm477 = vcmask 523264
    %v478 = vsel %vm477, %v469, -inf
    %479 = vmax.xlane.f32.xlu0 %v478
    %v480 = vpop.xlane.xlu0 %479
    %v481 = vsel %vm477, %v470, -inf
    %482 = vmax.xlane.f32.xlu0 %v481
    %v483 = vpop.xlane.xlu0 %482
    %v484 = vsel %vm477, %v471, -inf
    %485 = vmax.xlane.f32.xlu0 %v484
    %v486 = vpop.xlane.xlu0 %485
    %v487 = vsel %vm477, %v472, -inf
    %488 = vmax.xlane.f32.xlu0 %v487
    %v489 = vpop.xlane.xlu0 %488
    %v490 = vsel %vm477, %v473, -inf
    %491 = vmax.xlane.f32.xlu0 %v490
    %v492 = vpop.xlane.xlu0 %491
    %v493 = vsel %vm477, %v474, -inf
    %494 = vmax.xlane.f32.xlu0 %v493
    %v495 = vpop.xlane.xlu0 %494
    %v496 = vsel %vm477, %v475, -inf
    %497 = vmax.xlane.f32.xlu0 %v496
    %v498 = vpop.xlane.xlu0 %497
    %v499 = vsel %vm477, %v476, -inf
    %500 = vmax.xlane.f32.xlu0 %v499
    %v501 = vpop.xlane.xlu0 %500
    %v502 = vsub.f32 %v469, %v480
    %v503 = vsub.f32 %v470, %v483
    %v504 = vsub.f32 %v471, %v486
    %v505 = vsub.f32 %v472, %v489
    %v506 = vsub.f32 %v473, %v492
    %v507 = vsub.f32 %v474, %v495
    %v508 = vsub.f32 %v475, %v498
    %v509 = vsub.f32 %v476, %v501
    %v510 = vmul.f32 %v502, 1.442695
    %v511 = vpow.pop %v510
    %v512 = vmul.f32 %v503, 1.442695
    %v513 = vpow.pop %v512
    %v514 = vmul.f32 %v504, 1.442695
    %v515 = vpow.pop %v514
    %v516 = vmul.f32 %v505, 1.442695
    %v517 = vpow.pop %v516
    %v518 = vmul.f32 %v506, 1.442695
    %v519 = vpow.pop %v518
    %v520 = vmul.f32 %v507, 1.442695
    %v521 = vpow.pop %v520
    %v522 = vmul.f32 %v508, 1.442695
    %v523 = vpow.pop %v522
    %v524 = vmul.f32 %v509, 1.442695
    %v525 = vpow.pop %v524
    %v526 = vsel %vm477, %v511, 0.0
    %527 = vadd.xlane.f32.xlu0 %v526
    %v528 = vpop.xlane.xlu0 %527
    %v529 = vsel %vm477, %v513, 0.0
    %530 = vadd.xlane.f32.xlu0 %v529
    %v531 = vpop.xlane.xlu0 %530
    %v532 = vsel %vm477, %v515, 0.0
    %533 = vadd.xlane.f32.xlu0 %v532
    %v534 = vpop.xlane.xlu0 %533
    %v535 = vsel %vm477, %v517, 0.0
    %536 = vadd.xlane.f32.xlu0 %v535
    %v537 = vpop.xlane.xlu0 %536
    %v538 = vsel %vm477, %v519, 0.0
    %539 = vadd.xlane.f32.xlu0 %v538
    %v540 = vpop.xlane.xlu0 %539
    %v541 = vsel %vm477, %v521, 0.0
    %542 = vadd.xlane.f32.xlu0 %v541
    %v543 = vpop.xlane.xlu0 %542
    %v544 = vsel %vm477, %v523, 0.0
    %545 = vadd.xlane.f32.xlu0 %v544
    %v546 = vpop.xlane.xlu0 %545
    %v547 = vsel %vm477, %v525, 0.0
    %548 = vadd.xlane.f32.xlu0 %v547
    %v549 = vpop.xlane.xlu0 %548
    %v550 = vrcp.pop %v528
    %v551 = vrcp.pop %v531
    %v552 = vrcp.pop %v534
    %v553 = vrcp.pop %v537
    %v554 = vrcp.pop %v540
    %v555 = vrcp.pop %v543
    %v556 = vrcp.pop %v546
    %v557 = vrcp.pop %v549
    %v558 = vmul.f32 %v511, %v550
    %v559 = vmul.f32 %v513, %v551
    %v560 = vmul.f32 %v515, %v552
    %v561 = vmul.f32 %v517, %v553
    %v562 = vmul.f32 %v519, %v554
    %v563 = vmul.f32 %v521, %v555
    %v564 = vmul.f32 %v523, %v556
    %v565 = vmul.f32 %v525, %v557
    %566 = vrot.lane.b32.xlu0 %v262, 112
    %v567 = vpop.permute.xlu0 %566
    %568 = vrot.lane.b32.xlu0 %v267, 112
    %v569 = vpop.permute.xlu0 %568
    %570 = vrot.lane.b32.xlu0 %v272, 112
    %v571 = vpop.permute.xlu0 %570
    %572 = vrot.lane.b32.xlu0 %v277, 112
    %v573 = vpop.permute.xlu0 %572
    %574 = vrot.lane.b32.xlu0 %v282, 112
    %v575 = vpop.permute.xlu0 %574
    %576 = vrot.lane.b32.xlu0 %v287, 112
    %v577 = vpop.permute.xlu0 %576
    %578 = vrot.lane.b32.xlu0 %v292, 112
    %v579 = vpop.permute.xlu0 %578
    %580 = vrot.lane.b32.xlu0 %v297, 112
    %v581 = vpop.permute.xlu0 %580
    %v591 = vsel %vm477, %v558, 0
    %v594 = vsel %vm477, %v559, 0
    %v597 = vsel %vm477, %v560, 0
    %v600 = vsel %vm477, %v561, 0
    %v603 = vsel %vm477, %v562, 0
    %v606 = vsel %vm477, %v563, 0
    %v609 = vsel %vm477, %v564, 0
    %v612 = vsel %vm477, %v565, 0
    %614 = vmatprep.subr.mxu0 0.0
    %615 = vmatpush1.msra.mxu0 %v567
    %616 = vmatprep.subr.mxu0 0.0
    %617 = vmatpush1.msra.mxu0 %v569
    %618 = vmatprep.subr.mxu0 0.0
    %619 = vmatpush1.msra.mxu0 %v571
    %620 = vmatprep.subr.mxu0 0.0
    %621 = vmatpush1.msra.mxu0 %v573
    %622 = vmatprep.subr.mxu0 0.0
    %623 = vmatpush1.msra.mxu0 %v575
    %624 = vmatprep.subr.mxu0 0.0
    %625 = vmatpush1.msra.mxu0 %v577
    %626 = vmatprep.subr.mxu0 0.0
    %627 = vmatpush1.msra.mxu0 %v579
    %628 = vmatprep.subr.mxu0 0.0
    %629 = vmatpush1.msra.mxu0 %v581
    %630 = vmatprep.subr.mxu0 0.0
    %631 = vmatpush1.msra.mxu0 0.0
    %632 = vmatprep.subr.mxu0 0.0
    %633 = vmatpush1.msra.mxu0 0.0
    %634 = vmatprep.subr.mxu0 0.0
    %635 = vmatpush1.msra.mxu0 0.0
    %636 = vmatprep.subr.mxu0 0.0
    %637 = vmatpush1.msra.mxu0 0.0
    %638 = vmatprep.subr.mxu0 0.0
    %639 = vmatpush1.msra.mxu0 0.0
    %640 = vmatprep.subr.mxu0 0.0
    %641 = vmatpush1.msra.mxu0 0.0
    %642 = vmatprep.subr.mxu0 0.0
    %643 = vmatpush1.msra.mxu0 0.0
    %644 = vmatprep.subr.mxu0 0.0
    %645 = vmatpush1.msra.mxu0 0.0
    %646 = vmatprep.subr.mxu0 0.0
    %647 = vmatpush1.msra.mxu0 0.0
    %648 = vmatprep.subr.mxu0 0.0
    %649 = vmatpush1.msra.mxu0 0.0
    %650 = vmatprep.subr.mxu0 0.0
    %651 = vmatpush1.msra.mxu0 0.0
    %652 = vmatprep.subr.mxu0 0.0
    %653 = vmatpush1.msra.mxu0 0.0
    %654 = vmatprep.subr.mxu0 0.0
    %655 = vmatpush1.msra.mxu0 0.0
    %656 = vmatprep.subr.mxu0 0.0
    %657 = vmatpush1.msra.mxu0 0.0
    %658 = vmatprep.subr.mxu0 0.0
    %659 = vmatpush1.msra.mxu0 0.0
    %660 = vmatprep.subr.mxu0 0.0
    %661 = vmatpush1.msra.mxu0 0.0
    %662 = vmatprep.subr.mxu0 0.0
    %663 = vmatpush1.msra.mxu0 0.0
    %664 = vmatprep.subr.mxu0 0.0
    %665 = vmatpush1.msra.mxu0 0.0
    %666 = vmatprep.subr.mxu0 0.0
    %667 = vmatpush1.msra.mxu0 0.0
    %668 = vmatprep.subr.mxu0 0.0
    %669 = vmatpush1.msra.mxu0 0.0
    %670 = vmatprep.subr.mxu0 0.0
    %671 = vmatpush1.msra.mxu0 0.0
    %672 = vmatprep.subr.mxu0 0.0
    %673 = vmatpush1.msra.mxu0 0.0
    %674 = vmatprep.subr.mxu0 0.0
    %675 = vmatpush1.msra.mxu0 0.0
    %676 = vmatprep.subr.mxu0 0.0
    %677 = vmatpush1.msra.mxu0 0.0
    %678 = vmatprep.mubr.f32.mxu0 0.0
    %679 = vmatmul.mubr.f32.gmra.mrb[0].mxu0 %v591
    %v680 = vpop.f32.mrb[0].mxu0
    %v681 = vadd.f32 0.0, %v680
    %v682 = vpop.f32.mrb[0].mxu0
    %683 = vmatprep.mubr.f32.mxu0 0.0
    %684 = vmatmul.mubr.f32.gmra.mrb[0].mxu0 %v594
    %v685 = vpop.f32.mrb[0].mxu0
    %v686 = vadd.f32 0.0, %v685
    %v687 = vpop.f32.mrb[0].mxu0
    %688 = vmatprep.mubr.f32.mxu0 0.0
    %689 = vmatmul.mubr.f32.gmra.mrb[0].mxu0 %v597
    %v690 = vpop.f32.mrb[0].mxu0
    %v691 = vadd.f32 0.0, %v690
    %v692 = vpop.f32.mrb[0].mxu0
    %693 = vmatprep.mubr.f32.mxu0 0.0
    %694 = vmatmul.mubr.f32.gmra.mrb[0].mxu0 %v600
    %v695 = vpop.f32.mrb[0].mxu0
    %v696 = vadd.f32 0.0, %v695
    %v697 = vpop.f32.mrb[0].mxu0
    %698 = vmatprep.mubr.f32.mxu0 0.0
    %699 = vmatmul.mubr.f32.gmra.mrb[0].mxu0 %v603
    %v700 = vpop.f32.mrb[0].mxu0
    %v701 = vadd.f32 0.0, %v700
    %v702 = vpop.f32.mrb[0].mxu0
    %703 = vmatprep.mubr.f32.mxu0 0.0
    %704 = vmatmul.mubr.f32.gmra.mrb[0].mxu0 %v606
    %v705 = vpop.f32.mrb[0].mxu0
    %v706 = vadd.f32 0.0, %v705
    %v707 = vpop.f32.mrb[0].mxu0
    %708 = vmatprep.mubr.f32.mxu0 0.0
    %709 = vmatmul.mubr.f32.gmra.mrb[0].mxu0 %v609
    %v710 = vpop.f32.mrb[0].mxu0
    %v711 = vadd.f32 0.0, %v710
    %v712 = vpop.f32.mrb[0].mxu0
    %713 = vmatprep.mubr.f32.mxu0 0.0
    %714 = vmatmul.mubr.f32.gmra.mrb[0].mxu0 %v612
    %v715 = vpop.f32.mrb[0].mxu0
    %v716 = vadd.f32 0.0, %v715
    %v717 = vpop.f32.mrb[0].mxu0
    %718 = vdwg.mxu0
    %721 = vrot.lane.b32.xlu0 %v691, 8
    %v722 = vpop.permute.xlu0 %721
    %723 = vrot.lane.b32.xlu0 %v696, 8
    %v724 = vpop.permute.xlu0 %723
    %729 = vrot.lane.b32.xlu0 %v701, 16
    %v730 = vpop.permute.xlu0 %729
    %731 = vrot.lane.b32.xlu0 %v706, 16
    %v732 = vpop.permute.xlu0 %731
    %737 = vrot.lane.b32.xlu0 %v711, 24
    %v738 = vpop.permute.xlu0 %737
    %739 = vrot.lane.b32.xlu0 %v716, 24
    %v740 = vpop.permute.xlu0 %739
    %v743 = vsel %vm178, %v681, %v722
    %v744 = vsel %vm178, %v686, %v724
    %vm745 = vcmask 130048
    %v746 = vsel %vm745, %v743, %v730
    %v747 = vsel %vm745, %v744, %v732
    %vm748 = vcmask 195584
    %v749 = vsel %vm748, %v746, %v738
    %v750 = vsel %vm748, %v747, %v740
    %v751 = vld [vmem:[%s6] sm:$0xff]
    %v752 = vld [vmem:[%s6 + $0x8] sm:$0xff]
    %v753 = vld [vmem:[%s6 + $0x10] sm:$0xff]
    %v754 = vld [vmem:[%s6 + $0x18] sm:$0xff]
    %v755 = vld [vmem:[%s7] sm:$0x1]
    %v757 = vlaneseq
    %v758 = vshrl.u32 %v757, 7
    %v759 = vsub.s32 0, %v758
    %v760 = vrot.slane %v755, %v759
    %vm762 = vcmask 261120
    %v764 = vsel %vm762, %v749, 0
    %v767 = vsel %vm762, %v750, 0
    %769 = vmatprep.subr.mxu0 0.0
    %770 = vmatpush1.msra.mxu0 %v751
    %771 = vmatprep.subr.mxu0 0.0
    %772 = vmatpush1.msra.mxu0 %v752
    %773 = vmatprep.subr.mxu0 0.0
    %774 = vmatpush1.msra.mxu0 %v753
    %775 = vmatprep.subr.mxu0 0.0
    %776 = vmatpush1.msra.mxu0 %v754
    %777 = vmatprep.subr.mxu0 0.0
    %778 = vmatpush1.msra.mxu0 0.0
    %779 = vmatprep.subr.mxu0 0.0
    %780 = vmatpush1.msra.mxu0 0.0
    %781 = vmatprep.subr.mxu0 0.0
    %782 = vmatpush1.msra.mxu0 0.0
    %783 = vmatprep.subr.mxu0 0.0
    %784 = vmatpush1.msra.mxu0 0.0
    %785 = vmatprep.subr.mxu0 0.0
    %786 = vmatpush1.msra.mxu0 0.0
    %787 = vmatprep.subr.mxu0 0.0
    %788 = vmatpush1.msra.mxu0 0.0
    %789 = vmatprep.subr.mxu0 0.0
    %790 = vmatpush1.msra.mxu0 0.0
    %791 = vmatprep.subr.mxu0 0.0
    %792 = vmatpush1.msra.mxu0 0.0
    %793 = vmatprep.subr.mxu0 0.0
    %794 = vmatpush1.msra.mxu0 0.0
    %795 = vmatprep.subr.mxu0 0.0
    %796 = vmatpush1.msra.mxu0 0.0
    %797 = vmatprep.subr.mxu0 0.0
    %798 = vmatpush1.msra.mxu0 0.0
    %799 = vmatprep.subr.mxu0 0.0
    %800 = vmatpush1.msra.mxu0 0.0
    %801 = vmatprep.subr.mxu0 0.0
    %802 = vmatpush1.msra.mxu0 0.0
    %803 = vmatprep.subr.mxu0 0.0
    %804 = vmatpush1.msra.mxu0 0.0
    %805 = vmatprep.subr.mxu0 0.0
    %806 = vmatpush1.msra.mxu0 0.0
    %807 = vmatprep.subr.mxu0 0.0
    %808 = vmatpush1.msra.mxu0 0.0
    %809 = vmatprep.subr.mxu0 0.0
    %810 = vmatpush1.msra.mxu0 0.0
    %811 = vmatprep.subr.mxu0 0.0
    %812 = vmatpush1.msra.mxu0 0.0
    %813 = vmatprep.subr.mxu0 0.0
    %814 = vmatpush1.msra.mxu0 0.0
    %815 = vmatprep.subr.mxu0 0.0
    %816 = vmatpush1.msra.mxu0 0.0
    %817 = vmatprep.subr.mxu0 0.0
    %818 = vmatpush1.msra.mxu0 0.0
    %819 = vmatprep.subr.mxu0 0.0
    %820 = vmatpush1.msra.mxu0 0.0
    %821 = vmatprep.subr.mxu0 0.0
    %822 = vmatpush1.msra.mxu0 0.0
    %823 = vmatprep.subr.mxu0 0.0
    %824 = vmatpush1.msra.mxu0 0.0
    %825 = vmatprep.subr.mxu0 0.0
    %826 = vmatpush1.msra.mxu0 0.0
    %827 = vmatprep.subr.mxu0 0.0
    %828 = vmatpush1.msra.mxu0 0.0
    %829 = vmatprep.subr.mxu0 0.0
    %830 = vmatpush1.msra.mxu0 0.0
    %831 = vmatprep.subr.mxu0 0.0
    %832 = vmatpush1.msra.mxu0 0.0
    %833 = vmatprep.mubr.f32.mxu0 0.0
    %834 = vmatmul.mubr.f32.gmra.mrb[0].mxu0 %v764
    %v835 = vpop.f32.mrb[0].mxu0
    %v836 = vadd.f32 %v760, %v835
    %v837 = vpop.f32.mrb[0].mxu0
    %838 = vmatprep.mubr.f32.mxu0 0.0
    %839 = vmatmul.mubr.f32.gmra.mrb[0].mxu0 %v767
    %v840 = vpop.f32.mrb[0].mxu0
    %v841 = vadd.f32 %v760, %v840
    %v842 = vpop.f32.mrb[0].mxu0
    %843 = vdwg.mxu0
    %v844 = vadd.f32 %v836, %v153
    %v845 = vadd.f32 %v841, %v154
    %v846 = vld [vmem:[%s8] sm:$0x1]
    %v847 = vld [vmem:[%s9] sm:$0x1]
    %v848 = vsel %vm762, %v844, 0.0
    %849 = vadd.xlane.f32.xlu0 %v848
    %v850 = vpop.xlane.xlu0 %849
    %v851 = vsel %vm762, %v845, 0.0
    %852 = vadd.xlane.f32.xlu0 %v851
    %v853 = vpop.xlane.xlu0 %852
    %v854 = vrcp.pop 32.0
    %v855 = vmul.f32 %v850, %v854
    %v856 = vmul.f32 %v853, %v854
    %v857 = vsub.f32 %v844, %v855
    %v858 = vsub.f32 %v845, %v856
    %v859 = vmul.f32 %v857, %v857
    %v860 = vmul.f32 %v858, %v858
    %v861 = vsel %vm762, %v859, 0.0
    %862 = vadd.xlane.f32.xlu0 %v861
    %v863 = vpop.xlane.xlu0 %862
    %v864 = vsel %vm762, %v860, 0.0
    %865 = vadd.xlane.f32.xlu0 %v864
    %v866 = vpop.xlane.xlu0 %865
    %v867 = vmul.f32 %v863, %v854
    %v868 = vmul.f32 %v866, %v854
    %v869 = vadd.f32 %v867, 1e-05
    %v870 = vadd.f32 %v868, 1e-05
    %v871 = vrsqrt.pop %v869
    %v872 = vrsqrt.pop %v870
    %v873 = vmul.f32 %v857, %v871
    %v874 = vmul.f32 %v858, %v872
    %v876 = vlaneseq
    %v877 = vshrl.u32 %v876, 7
    %v878 = vsub.s32 0, %v877
    %v879 = vrot.slane %v846, %v878
    %v881 = vmul.f32 %v873, %v879
    %v882 = vmul.f32 %v874, %v879
    %v884 = vlaneseq
    %v885 = vshrl.u32 %v884, 7
    %v886 = vsub.s32 0, %v885
    %v887 = vrot.slane %v847, %v886
    %v889 = vadd.f32 %v881, %v887
    %v890 = vadd.f32 %v882, %v887
    %v891 = vld [vmem:[%s10] sm:$0xff]
    %v892 = vld [vmem:[%s10 + $0x8] sm:$0xff]
    %v893 = vld [vmem:[%s10 + $0x10] sm:$0xff]
    %v894 = vld [vmem:[%s10 + $0x18] sm:$0xff]
    %v895 = vld [vmem:[%s11] sm:$0x1]
    %v897 = vlaneseq
    %v898 = vshrl.u32 %v897, 7
    %v899 = vsub.s32 0, %v898
    %v900 = vrot.slane %v895, %v899
    %v903 = vsel %vm762, %v889, 0
    %v906 = vsel %vm762, %v890, 0
    %908 = vmatprep.subr.mxu0 0.0
    %909 = vmatpush1.msra.mxu0 %v891
    %910 = vmatprep.subr.mxu0 0.0
    %911 = vmatpush1.msra.mxu0 %v892
    %912 = vmatprep.subr.mxu0 0.0
    %913 = vmatpush1.msra.mxu0 %v893
    %914 = vmatprep.subr.mxu0 0.0
    %915 = vmatpush1.msra.mxu0 %v894
    %916 = vmatprep.subr.mxu0 0.0
    %917 = vmatpush1.msra.mxu0 0.0
    %918 = vmatprep.subr.mxu0 0.0
    %919 = vmatpush1.msra.mxu0 0.0
    %920 = vmatprep.subr.mxu0 0.0
    %921 = vmatpush1.msra.mxu0 0.0
    %922 = vmatprep.subr.mxu0 0.0
    %923 = vmatpush1.msra.mxu0 0.0
    %924 = vmatprep.subr.mxu0 0.0
    %925 = vmatpush1.msra.mxu0 0.0
    %926 = vmatprep.subr.mxu0 0.0
    %927 = vmatpush1.msra.mxu0 0.0
    %928 = vmatprep.subr.mxu0 0.0
    %929 = vmatpush1.msra.mxu0 0.0
    %930 = vmatprep.subr.mxu0 0.0
    %931 = vmatpush1.msra.mxu0 0.0
    %932 = vmatprep.subr.mxu0 0.0
    %933 = vmatpush1.msra.mxu0 0.0
    %934 = vmatprep.subr.mxu0 0.0
    %935 = vmatpush1.msra.mxu0 0.0
    %936 = vmatprep.subr.mxu0 0.0
    %937 = vmatpush1.msra.mxu0 0.0
    %938 = vmatprep.subr.mxu0 0.0
    %939 = vmatpush1.msra.mxu0 0.0
    %940 = vmatprep.subr.mxu0 0.0
    %941 = vmatpush1.msra.mxu0 0.0
    %942 = vmatprep.subr.mxu0 0.0
    %943 = vmatpush1.msra.mxu0 0.0
    %944 = vmatprep.subr.mxu0 0.0
    %945 = vmatpush1.msra.mxu0 0.0
    %946 = vmatprep.subr.mxu0 0.0
    %947 = vmatpush1.msra.mxu0 0.0
    %948 = vmatprep.subr.mxu0 0.0
    %949 = vmatpush1.msra.mxu0 0.0
    %950 = vmatprep.subr.mxu0 0.0
    %951 = vmatpush1.msra.mxu0 0.0
    %952 = vmatprep.subr.mxu0 0.0
    %953 = vmatpush1.msra.mxu0 0.0
    %954 = vmatprep.subr.mxu0 0.0
    %955 = vmatpush1.msra.mxu0 0.0
    %956 = vmatprep.subr.mxu0 0.0
    %957 = vmatpush1.msra.mxu0 0.0
    %958 = vmatprep.subr.mxu0 0.0
    %959 = vmatpush1.msra.mxu0 0.0
    %960 = vmatprep.subr.mxu0 0.0
    %961 = vmatpush1.msra.mxu0 0.0
    %962 = vmatprep.subr.mxu0 0.0
    %963 = vmatpush1.msra.mxu0 0.0
    %964 = vmatprep.subr.mxu0 0.0
    %965 = vmatpush1.msra.mxu0 0.0
    %966 = vmatprep.subr.mxu0 0.0
    %967 = vmatpush1.msra.mxu0 0.0
    %968 = vmatprep.subr.mxu0 0.0
    %969 = vmatpush1.msra.mxu0 0.0
    %970 = vmatprep.subr.mxu0 0.0
    %971 = vmatpush1.msra.mxu0 0.0
    %972 = vmatprep.mubr.f32.mxu0 0.0
    %973 = vmatmul.mubr.f32.gmra.mrb[0].mxu0 %v903
    %v974 = vpop.f32.mrb[0].mxu0
    %v975 = vadd.f32 %v900, %v974
    %v976 = vpop.f32.mrb[0].mxu0
    %977 = vmatprep.mubr.f32.mxu0 0.0
    %978 = vmatmul.mubr.f32.gmra.mrb[0].mxu0 %v906
    %v979 = vpop.f32.mrb[0].mxu0
    %v980 = vadd.f32 %v900, %v979
    %v981 = vpop.f32.mrb[0].mxu0
    %982 = vdwg.mxu0
    %v983 = vmax.f32 %v975, 0.0
    %v984 = vmax.f32 %v980, 0.0
    %v985 = vld [vmem:[%s12] sm:$0xff]
    %v986 = vld [vmem:[%s12 + $0x8] sm:$0xff]
    %v987 = vld [vmem:[%s12 + $0x10] sm:$0xff]
    %v988 = vld [vmem:[%s12 + $0x18] sm:$0xff]
    %v989 = vld [vmem:[%s12 + $0x20] sm:$0xff]
    %v990 = vld [vmem:[%s12 + $0x28] sm:$0xff]
    %v991 = vld [vmem:[%s12 + $0x30] sm:$0xff]
    %v992 = vld [vmem:[%s12 + $0x38] sm:$0xff]
    %v993 = vld [vmem:[%s12 + $0x40] sm:$0xff]
    %v994 = vld [vmem:[%s12 + $0x48] sm:$0xff]
    %v995 = vld [vmem:[%s12 + $0x50] sm:$0xff]
    %v996 = vld [vmem:[%s12 + $0x58] sm:$0xff]
    %v997 = vld [vmem:[%s12 + $0x60] sm:$0xff]
    %v998 = vld [vmem:[%s12 + $0x68] sm:$0xff]
    %v999 = vld [vmem:[%s12 + $0x70] sm:$0xff]
    %v1000 = vld [vmem:[%s12 + $0x78] sm:$0xff]
    %v1001 = vld [vmem:[%s13] sm:$0x1]
    %v1003 = vlaneseq
    %v1004 = vshrl.u32 %v1003, 7
    %v1005 = vsub.s32 0, %v1004
    %v1006 = vrot.slane %v1001, %v1005
    %1008 = vmatprep.subr.mxu0 0.0
    %1009 = vmatpush1.msra.mxu0 %v985
    %1010 = vmatprep.subr.mxu0 0.0
    %1011 = vmatpush1.msra.mxu0 %v986
    %1012 = vmatprep.subr.mxu0 0.0
    %1013 = vmatpush1.msra.mxu0 %v987
    %1014 = vmatprep.subr.mxu0 0.0
    %1015 = vmatpush1.msra.mxu0 %v988
    %1016 = vmatprep.subr.mxu0 0.0
    %1017 = vmatpush1.msra.mxu0 %v989
    %1018 = vmatprep.subr.mxu0 0.0
    %1019 = vmatpush1.msra.mxu0 %v990
    %1020 = vmatprep.subr.mxu0 0.0
    %1021 = vmatpush1.msra.mxu0 %v991
    %1022 = vmatprep.subr.mxu0 0.0
    %1023 = vmatpush1.msra.mxu0 %v992
    %1024 = vmatprep.subr.mxu0 0.0
    %1025 = vmatpush1.msra.mxu0 %v993
    %1026 = vmatprep.subr.mxu0 0.0
    %1027 = vmatpush1.msra.mxu0 %v994
    %1028 = vmatprep.subr.mxu0 0.0
    %1029 = vmatpush1.msra.mxu0 %v995
    %1030 = vmatprep.subr.mxu0 0.0
    %1031 = vmatpush1.msra.mxu0 %v996
    %1032 = vmatprep.subr.mxu0 0.0
    %1033 = vmatpush1.msra.mxu0 %v997
    %1034 = vmatprep.subr.mxu0 0.0
    %1035 = vmatpush1.msra.mxu0 %v998
    %1036 = vmatprep.subr.mxu0 0.0
    %1037 = vmatpush1.msra.mxu0 %v999
    %1038 = vmatprep.subr.mxu0 0.0
    %1039 = vmatpush1.msra.mxu0 %v1000
    %1040 = vmatprep.subr.mxu0 0.0
    %1041 = vmatpush1.msra.mxu0 0.0
    %1042 = vmatprep.subr.mxu0 0.0
    %1043 = vmatpush1.msra.mxu0 0.0
    %1044 = vmatprep.subr.mxu0 0.0
    %1045 = vmatpush1.msra.mxu0 0.0
    %1046 = vmatprep.subr.mxu0 0.0
    %1047 = vmatpush1.msra.mxu0 0.0
    %1048 = vmatprep.subr.mxu0 0.0
    %1049 = vmatpush1.msra.mxu0 0.0
    %1050 = vmatprep.subr.mxu0 0.0
    %1051 = vmatpush1.msra.mxu0 0.0
    %1052 = vmatprep.subr.mxu0 0.0
    %1053 = vmatpush1.msra.mxu0 0.0
    %1054 = vmatprep.subr.mxu0 0.0
    %1055 = vmatpush1.msra.mxu0 0.0
    %1056 = vmatprep.subr.mxu0 0.0
    %1057 = vmatpush1.msra.mxu0 0.0
    %1058 = vmatprep.subr.mxu0 0.0
    %1059 = vmatpush1.msra.mxu0 0.0
    %1060 = vmatprep.subr.mxu0 0.0
    %1061 = vmatpush1.msra.mxu0 0.0
    %1062 = vmatprep.subr.mxu0 0.0
    %1063 = vmatpush1.msra.mxu0 0.0
    %1064 = vmatprep.subr.mxu0 0.0
    %1065 = vmatpush1.msra.mxu0 0.0
    %1066 = vmatprep.subr.mxu0 0.0
    %1067 = vmatpush1.msra.mxu0 0.0
    %1068 = vmatprep.subr.mxu0 0.0
    %1069 = vmatpush1.msra.mxu0 0.0
    %1070 = vmatprep.subr.mxu0 0.0
    %1071 = vmatpush1.msra.mxu0 0.0
    %1072 = vmatprep.mubr.f32.mxu0 0.0
    %1073 = vmatmul.mubr.f32.gmra.mrb[0].mxu0 %v983
    %v1074 = vpop.f32.mrb[0].mxu0
    %v1075 = vadd.f32 %v1006, %v1074
    %v1076 = vpop.f32.mrb[0].mxu0
    %1077 = vmatprep.mubr.f32.mxu0 0.0
    %1078 = vmatmul.mubr.f32.gmra.mrb[0].mxu0 %v984
    %v1079 = vpop.f32.mrb[0].mxu0
    %v1080 = vadd.f32 %v1006, %v1079
    %v1081 = vpop.f32.mrb[0].mxu0
    %1082 = vdwg.mxu0
    %v1083 = vadd.f32 %v1075, %v889
    %v1084 = vadd.f32 %v1080, %v890
    %v1085 = vld [vmem:[%s14] sm:$0x1]
    %v1086 = vld [vmem:[%s15] sm:$0x1]
    %v1087 = vsel %vm762, %v1083, 0.0
    %1088 = vadd.xlane.f32.xlu0 %v1087
    %v1089 = vpop.xlane.xlu0 %1088
    %v1090 = vsel %vm762, %v1084, 0.0
    %1091 = vadd.xlane.f32.xlu0 %v1090
    %v1092 = vpop.xlane.xlu0 %1091
    %v1093 = vmul.f32 %v1089, %v854
    %v1094 = vmul.f32 %v1092, %v854
    %v1095 = vsub.f32 %v1083, %v1093
    %v1096 = vsub.f32 %v1084, %v1094
    %v1097 = vmul.f32 %v1095, %v1095
    %v1098 = vmul.f32 %v1096, %v1096
    %v1099 = vsel %vm762, %v1097, 0.0
    %1100 = vadd.xlane.f32.xlu0 %v1099
    %v1101 = vpop.xlane.xlu0 %1100
    %v1102 = vsel %vm762, %v1098, 0.0
    %1103 = vadd.xlane.f32.xlu0 %v1102
    %v1104 = vpop.xlane.xlu0 %1103
    %v1105 = vmul.f32 %v1101, %v854
    %v1106 = vmul.f32 %v1104, %v854
    %v1107 = vadd.f32 %v1105, 1e-05
    %v1108 = vadd.f32 %v1106, 1e-05
    %v1109 = vrsqrt.pop %v1107
    %v1110 = vrsqrt.pop %v1108
    %v1111 = vmul.f32 %v1095, %v1109
    %v1112 = vmul.f32 %v1096, %v1110
    %v1114 = vlaneseq
    %v1115 = vshrl.u32 %v1114, 7
    %v1116 = vsub.s32 0, %v1115
    %v1117 = vrot.slane %v1085, %v1116
    %v1119 = vmul.f32 %v1111, %v1117
    %v1120 = vmul.f32 %v1112, %v1117
    %v1122 = vlaneseq
    %v1123 = vshrl.u32 %v1122, 7
    %v1124 = vsub.s32 0, %v1123
    %v1125 = vrot.slane %v1086, %v1124
    %v1127 = vadd.f32 %v1119, %v1125
    %v1128 = vadd.f32 %v1120, %v1125
    %1131 = vrot.lane.b32.xlu0 %v1127, 120
    %v1132 = vpop.permute.xlu0 %1131
    %1133 = vrot.lane.b32.xlu0 %v1128, 120
    %v1134 = vpop.permute.xlu0 %1133
    %1135 = vrot.lane.b32.xlu0 %v1127, 112
    %v1136 = vpop.permute.xlu0 %1135
    %1137 = vrot.lane.b32.xlu0 %v1128, 112
    %v1138 = vpop.permute.xlu0 %1137
    %1139 = vrot.lane.b32.xlu0 %v1127, 104
    %v1140 = vpop.permute.xlu0 %1139
    %1141 = vrot.lane.b32.xlu0 %v1128, 104
    %v1142 = vpop.permute.xlu0 %1141
    %s1143 = scalar_lea.vmem %s5, 8
    %v1144 = vld [vmem:[%s1143] sm:$0xff]
    %v1145 = vsel %vm178, %v1127, 0
    %v1147 = vsel %vm178, %v1128, 0
    %v1149 = vsel %vm178, %v1132, 0
    %v1151 = vsel %vm178, %v1134, 0
    %v1153 = vsel %vm178, %v1136, 0
    %v1155 = vsel %vm178, %v1138, 0
    %v1157 = vsel %vm178, %v1140, 0
    %v1159 = vsel %vm178, %v1142, 0
    %1161 = vmatprep.subr.mxu0 0.0
    %1162 = vmatpush1.msra.mxu0 %v1144
    %1163 = vmatprep.subr.mxu0 0.0
    %1164 = vmatpush1.msra.mxu0 0.0
    %1165 = vmatprep.subr.mxu0 0.0
    %1166 = vmatpush1.msra.mxu0 0.0
    %1167 = vmatprep.subr.mxu0 0.0
    %1168 = vmatpush1.msra.mxu0 0.0
    %1169 = vmatprep.subr.mxu0 0.0
    %1170 = vmatpush1.msra.mxu0 0.0
    %1171 = vmatprep.subr.mxu0 0.0
    %1172 = vmatpush1.msra.mxu0 0.0
    %1173 = vmatprep.subr.mxu0 0.0
    %1174 = vmatpush1.msra.mxu0 0.0
    %1175 = vmatprep.subr.mxu0 0.0
    %1176 = vmatpush1.msra.mxu0 0.0
    %1177 = vmatprep.subr.mxu0 0.0
    %1178 = vmatpush1.msra.mxu0 0.0
    %1179 = vmatprep.subr.mxu0 0.0
    %1180 = vmatpush1.msra.mxu0 0.0
    %1181 = vmatprep.subr.mxu0 0.0
    %1182 = vmatpush1.msra.mxu0 0.0
    %1183 = vmatprep.subr.mxu0 0.0
    %1184 = vmatpush1.msra.mxu0 0.0
    %1185 = vmatprep.subr.mxu0 0.0
    %1186 = vmatpush1.msra.mxu0 0.0
    %1187 = vmatprep.subr.mxu0 0.0
    %1188 = vmatpush1.msra.mxu0 0.0
    %1189 = vmatprep.subr.mxu0 0.0
    %1190 = vmatpush1.msra.mxu0 0.0
    %1191 = vmatprep.subr.mxu0 0.0
    %1192 = vmatpush1.msra.mxu0 0.0
    %1193 = vmatprep.subr.mxu0 0.0
    %1194 = vmatpush1.msra.mxu0 0.0
    %1195 = vmatprep.subr.mxu0 0.0
    %1196 = vmatpush1.msra.mxu0 0.0
    %1197 = vmatprep.subr.mxu0 0.0
    %1198 = vmatpush1.msra.mxu0 0.0
    %1199 = vmatprep.subr.mxu0 0.0
    %1200 = vmatpush1.msra.mxu0 0.0
    %1201 = vmatprep.subr.mxu0 0.0
    %1202 = vmatpush1.msra.mxu0 0.0
    %1203 = vmatprep.subr.mxu0 0.0
    %1204 = vmatpush1.msra.mxu0 0.0
    %1205 = vmatprep.subr.mxu0 0.0
    %1206 = vmatpush1.msra.mxu0 0.0
    %1207 = vmatprep.subr.mxu0 0.0
    %1208 = vmatpush1.msra.mxu0 0.0
    %1209 = vmatprep.subr.mxu0 0.0
    %1210 = vmatpush1.msra.mxu0 0.0
    %1211 = vmatprep.subr.mxu0 0.0
    %1212 = vmatpush1.msra.mxu0 0.0
    %1213 = vmatprep.subr.mxu0 0.0
    %1214 = vmatpush1.msra.mxu0 0.0
    %1215 = vmatprep.subr.mxu0 0.0
    %1216 = vmatpush1.msra.mxu0 0.0
    %1217 = vmatprep.subr.mxu0 0.0
    %1218 = vmatpush1.msra.mxu0 0.0
    %1219 = vmatprep.subr.mxu0 0.0
    %1220 = vmatpush1.msra.mxu0 0.0
    %1221 = vmatprep.subr.mxu0 0.0
    %1222 = vmatpush1.msra.mxu0 0.0
    %1223 = vmatprep.subr.mxu0 0.0
    %1224 = vmatpush1.msra.mxu0 0.0
    %1225 = vmatprep.mubr.f32.mxu0 0.0
    %1226 = vmatmul.mubr.f32.gmra.mrb[0].mxu0 %v1145
    %v1227 = vpop.f32.mrb[0].mxu0
    %v1228 = vadd.f32 0.0, %v1227
    %v1229 = vpop.f32.mrb[0].mxu0
    %1230 = vmatprep.mubr.f32.mxu0 0.0
    %1231 = vmatmul.mubr.f32.gmra.mrb[0].mxu0 %v1147
    %v1232 = vpop.f32.mrb[0].mxu0
    %v1233 = vadd.f32 0.0, %v1232
    %v1234 = vpop.f32.mrb[0].mxu0
    %1235 = vmatprep.mubr.f32.mxu0 0.0
    %1236 = vmatmul.mubr.f32.gmra.mrb[0].mxu0 %v1149
    %v1237 = vpop.f32.mrb[0].mxu0
    %v1238 = vadd.f32 0.0, %v1237
    %v1239 = vpop.f32.mrb[0].mxu0
    %1240 = vmatprep.mubr.f32.mxu0 0.0
    %1241 = vmatmul.mubr.f32.gmra.mrb[0].mxu0 %v1151
    %v1242 = vpop.f32.mrb[0].mxu0
    %v1243 = vadd.f32 0.0, %v1242
    %v1244 = vpop.f32.mrb[0].mxu0
    %1245 = vmatprep.mubr.f32.mxu0 0.0
    %1246 = vmatmul.mubr.f32.gmra.mrb[0].mxu0 %v1153
    %v1247 = vpop.f32.mrb[0].mxu0
    %v1248 = vadd.f32 0.0, %v1247
    %v1249 = vpop.f32.mrb[0].mxu0
    %1250 = vmatprep.mubr.f32.mxu0 0.0
    %1251 = vmatmul.mubr.f32.gmra.mrb[0].mxu0 %v1155
    %v1252 = vpop.f32.mrb[0].mxu0
    %v1253 = vadd.f32 0.0, %v1252
    %v1254 = vpop.f32.mrb[0].mxu0
    %1255 = vmatprep.mubr.f32.mxu0 0.0
    %1256 = vmatmul.mubr.f32.gmra.mrb[0].mxu0 %v1157
    %v1257 = vpop.f32.mrb[0].mxu0
    %v1258 = vadd.f32 0.0, %v1257
    %v1259 = vpop.f32.mrb[0].mxu0
    %1260 = vmatprep.mubr.f32.mxu0 0.0
    %1261 = vmatmul.mubr.f32.gmra.mrb[0].mxu0 %v1159
    %v1262 = vpop.f32.mrb[0].mxu0
    %v1263 = vadd.f32 0.0, %v1262
    %v1264 = vpop.f32.mrb[0].mxu0
    %1265 = vdwg.mxu0
    %1274 = vrot.lane.b32.xlu0 %v1228, 120
    %v1275 = vpop.permute.xlu0 %1274
    %1276 = vrot.lane.b32.xlu0 %v1233, 120
    %v1277 = vpop.permute.xlu0 %1276
    %1278 = vrot.lane.b32.xlu0 %v1238, 120
    %v1279 = vpop.permute.xlu0 %1278
    %1280 = vrot.lane.b32.xlu0 %v1243, 120
    %v1281 = vpop.permute.xlu0 %1280
    %1282 = vrot.lane.b32.xlu0 %v1248, 120
    %v1283 = vpop.permute.xlu0 %1282
    %1284 = vrot.lane.b32.xlu0 %v1253, 120
    %v1285 = vpop.permute.xlu0 %1284
    %1286 = vrot.lane.b32.xlu0 %v1258, 120
    %v1287 = vpop.permute.xlu0 %1286
    %1288 = vrot.lane.b32.xlu0 %v1263, 120
    %v1289 = vpop.permute.xlu0 %1288
    %v1290 = vsel %vm178, %v1228, 0
    %v1292 = vsel %vm178, %v1233, 0
    %v1294 = vsel %vm178, %v1238, 0
    %v1296 = vsel %vm178, %v1243, 0
    %v1298 = vsel %vm178, %v1248, 0
    %v1300 = vsel %vm178, %v1253, 0
    %v1302 = vsel %vm178, %v1258, 0
    %v1304 = vsel %vm178, %v1263, 0
    %v1306 = vsel %vm178, %v1275, 0
    %v1308 = vsel %vm178, %v1277, 0
    %v1310 = vsel %vm178, %v1279, 0
    %v1312 = vsel %vm178, %v1281, 0
    %v1314 = vsel %vm178, %v1283, 0
    %v1316 = vsel %vm178, %v1285, 0
    %v1318 = vsel %vm178, %v1287, 0
    %v1320 = vsel %vm178, %v1289, 0
    %1322 = vmatprep.subr.mxu0 0.0
    %1323 = vmatpush1.xpose.msra.mxu0 %v1306
    %1324 = vmatprep.subr.mxu0 0.0
    %1325 = vmatpush1.xpose.msra.mxu0 %v1308
    %1326 = vmatprep.subr.mxu0 0.0
    %1327 = vmatpush1.xpose.msra.mxu0 %v1310
    %1328 = vmatprep.subr.mxu0 0.0
    %1329 = vmatpush1.xpose.msra.mxu0 %v1312
    %1330 = vmatprep.subr.mxu0 0.0
    %1331 = vmatpush1.xpose.msra.mxu0 %v1314
    %1332 = vmatprep.subr.mxu0 0.0
    %1333 = vmatpush1.xpose.msra.mxu0 %v1316
    %1334 = vmatprep.subr.mxu0 0.0
    %1335 = vmatpush1.xpose.msra.mxu0 %v1318
    %1336 = vmatprep.subr.mxu0 0.0
    %1337 = vmatpush1.xpose.msra.mxu0 %v1320
    %1338 = vmatprep.subr.mxu0 0.0
    %1339 = vmatpush1.xpose.msra.mxu0 0.0
    %1340 = vmatprep.subr.mxu0 0.0
    %1341 = vmatpush1.xpose.msra.mxu0 0.0
    %1342 = vmatprep.subr.mxu0 0.0
    %1343 = vmatpush1.xpose.msra.mxu0 0.0
    %1344 = vmatprep.subr.mxu0 0.0
    %1345 = vmatpush1.xpose.msra.mxu0 0.0
    %1346 = vmatprep.subr.mxu0 0.0
    %1347 = vmatpush1.xpose.msra.mxu0 0.0
    %1348 = vmatprep.subr.mxu0 0.0
    %1349 = vmatpush1.xpose.msra.mxu0 0.0
    %1350 = vmatprep.subr.mxu0 0.0
    %1351 = vmatpush1.xpose.msra.mxu0 0.0
    %1352 = vmatprep.subr.mxu0 0.0
    %1353 = vmatpush1.xpose.msra.mxu0 0.0
    %1354 = vmatprep.subr.mxu0 0.0
    %1355 = vmatpush1.xpose.msra.mxu0 0.0
    %1356 = vmatprep.subr.mxu0 0.0
    %1357 = vmatpush1.xpose.msra.mxu0 0.0
    %1358 = vmatprep.subr.mxu0 0.0
    %1359 = vmatpush1.xpose.msra.mxu0 0.0
    %1360 = vmatprep.subr.mxu0 0.0
    %1361 = vmatpush1.xpose.msra.mxu0 0.0
    %1362 = vmatprep.subr.mxu0 0.0
    %1363 = vmatpush1.xpose.msra.mxu0 0.0
    %1364 = vmatprep.subr.mxu0 0.0
    %1365 = vmatpush1.xpose.msra.mxu0 0.0
    %1366 = vmatprep.subr.mxu0 0.0
    %1367 = vmatpush1.xpose.msra.mxu0 0.0
    %1368 = vmatprep.subr.mxu0 0.0
    %1369 = vmatpush1.xpose.msra.mxu0 0.0
    %1370 = vmatprep.subr.mxu0 0.0
    %1371 = vmatpush1.xpose.msra.mxu0 0.0
    %1372 = vmatprep.subr.mxu0 0.0
    %1373 = vmatpush1.xpose.msra.mxu0 0.0
    %1374 = vmatprep.subr.mxu0 0.0
    %1375 = vmatpush1.xpose.msra.mxu0 0.0
    %1376 = vmatprep.subr.mxu0 0.0
    %1377 = vmatpush1.xpose.msra.mxu0 0.0
    %1378 = vmatprep.subr.mxu0 0.0
    %1379 = vmatpush1.xpose.msra.mxu0 0.0
    %1380 = vmatprep.subr.mxu0 0.0
    %1381 = vmatpush1.xpose.msra.mxu0 0.0
    %1382 = vmatprep.subr.mxu0 0.0
    %1383 = vmatpush1.xpose.msra.mxu0 0.0
    %1384 = vmatprep.subr.mxu0 0.0
    %1385 = vmatpush1.xpose.msra.mxu0 0.0
    %1386 = vmatprep.mubr.f32.mxu0 0.0
    %1387 = vmatmul.mubr.f32.gmra.mrb[0].mxu0 %v1290
    %v1388 = vpop.f32.mrb[0].mxu0
    %v1389 = vadd.f32 0.0, %v1388
    %v1390 = vpop.f32.mrb[0].mxu0
    %1391 = vmatprep.mubr.f32.mxu0 0.0
    %1392 = vmatmul.mubr.f32.gmra.mrb[0].mxu0 %v1292
    %v1393 = vpop.f32.mrb[0].mxu0
    %v1394 = vadd.f32 0.0, %v1393
    %v1395 = vpop.f32.mrb[0].mxu0
    %1396 = vmatprep.mubr.f32.mxu0 0.0
    %1397 = vmatmul.mubr.f32.gmra.mrb[0].mxu0 %v1294
    %v1398 = vpop.f32.mrb[0].mxu0
    %v1399 = vadd.f32 0.0, %v1398
    %v1400 = vpop.f32.mrb[0].mxu0
    %1401 = vmatprep.mubr.f32.mxu0 0.0
    %1402 = vmatmul.mubr.f32.gmra.mrb[0].mxu0 %v1296
    %v1403 = vpop.f32.mrb[0].mxu0
    %v1404 = vadd.f32 0.0, %v1403
    %v1405 = vpop.f32.mrb[0].mxu0
    %1406 = vmatprep.mubr.f32.mxu0 0.0
    %1407 = vmatmul.mubr.f32.gmra.mrb[0].mxu0 %v1298
    %v1408 = vpop.f32.mrb[0].mxu0
    %v1409 = vadd.f32 0.0, %v1408
    %v1410 = vpop.f32.mrb[0].mxu0
    %1411 = vmatprep.mubr.f32.mxu0 0.0
    %1412 = vmatmul.mubr.f32.gmra.mrb[0].mxu0 %v1300
    %v1413 = vpop.f32.mrb[0].mxu0
    %v1414 = vadd.f32 0.0, %v1413
    %v1415 = vpop.f32.mrb[0].mxu0
    %1416 = vmatprep.mubr.f32.mxu0 0.0
    %1417 = vmatmul.mubr.f32.gmra.mrb[0].mxu0 %v1302
    %v1418 = vpop.f32.mrb[0].mxu0
    %v1419 = vadd.f32 0.0, %v1418
    %v1420 = vpop.f32.mrb[0].mxu0
    %1421 = vmatprep.mubr.f32.mxu0 0.0
    %1422 = vmatmul.mubr.f32.gmra.mrb[0].mxu0 %v1304
    %v1423 = vpop.f32.mrb[0].mxu0
    %v1424 = vadd.f32 0.0, %v1423
    %v1425 = vpop.f32.mrb[0].mxu0
    %1426 = vdwg.mxu0
    %v1427 = vmul.f32 %v1389, 0.17677669
    %v1428 = vmul.f32 %v1394, 0.17677669
    %v1429 = vmul.f32 %v1399, 0.17677669
    %v1430 = vmul.f32 %v1404, 0.17677669
    %v1431 = vmul.f32 %v1409, 0.17677669
    %v1432 = vmul.f32 %v1414, 0.17677669
    %v1433 = vmul.f32 %v1419, 0.17677669
    %v1434 = vmul.f32 %v1424, 0.17677669
    %v1435 = vadd.f32 %v1427, %v155
    %v1436 = vadd.f32 %v1428, %v156
    %v1437 = vadd.f32 %v1429, %v157
    %v1438 = vadd.f32 %v1430, %v158
    %v1439 = vadd.f32 %v1431, %v159
    %v1440 = vadd.f32 %v1432, %v160
    %v1441 = vadd.f32 %v1433, %v161
    %v1442 = vadd.f32 %v1434, %v162
    %v1443 = vsel %vm477, %v1435, -inf
    %1444 = vmax.xlane.f32.xlu0 %v1443
    %v1445 = vpop.xlane.xlu0 %1444
    %v1446 = vsel %vm477, %v1436, -inf
    %1447 = vmax.xlane.f32.xlu0 %v1446
    %v1448 = vpop.xlane.xlu0 %1447
    %v1449 = vsel %vm477, %v1437, -inf
    %1450 = vmax.xlane.f32.xlu0 %v1449
    %v1451 = vpop.xlane.xlu0 %1450
    %v1452 = vsel %vm477, %v1438, -inf
    %1453 = vmax.xlane.f32.xlu0 %v1452
    %v1454 = vpop.xlane.xlu0 %1453
    %v1455 = vsel %vm477, %v1439, -inf
    %1456 = vmax.xlane.f32.xlu0 %v1455
    %v1457 = vpop.xlane.xlu0 %1456
    %v1458 = vsel %vm477, %v1440, -inf
    %1459 = vmax.xlane.f32.xlu0 %v1458
    %v1460 = vpop.xlane.xlu0 %1459
    %v1461 = vsel %vm477, %v1441, -inf
    %1462 = vmax.xlane.f32.xlu0 %v1461
    %v1463 = vpop.xlane.xlu0 %1462
    %v1464 = vsel %vm477, %v1442, -inf
    %1465 = vmax.xlane.f32.xlu0 %v1464
    %v1466 = vpop.xlane.xlu0 %1465
    %v1467 = vsub.f32 %v1435, %v1445
    %v1468 = vsub.f32 %v1436, %v1448
    %v1469 = vsub.f32 %v1437, %v1451
    %v1470 = vsub.f32 %v1438, %v1454
    %v1471 = vsub.f32 %v1439, %v1457
    %v1472 = vsub.f32 %v1440, %v1460
    %v1473 = vsub.f32 %v1441, %v1463
    %v1474 = vsub.f32 %v1442, %v1466
    %v1475 = vmul.f32 %v1467, 1.442695
    %v1476 = vpow.pop %v1475
    %v1477 = vmul.f32 %v1468, 1.442695
    %v1478 = vpow.pop %v1477
    %v1479 = vmul.f32 %v1469, 1.442695
    %v1480 = vpow.pop %v1479
    %v1481 = vmul.f32 %v1470, 1.442695
    %v1482 = vpow.pop %v1481
    %v1483 = vmul.f32 %v1471, 1.442695
    %v1484 = vpow.pop %v1483
    %v1485 = vmul.f32 %v1472, 1.442695
    %v1486 = vpow.pop %v1485
    %v1487 = vmul.f32 %v1473, 1.442695
    %v1488 = vpow.pop %v1487
    %v1489 = vmul.f32 %v1474, 1.442695
    %v1490 = vpow.pop %v1489
    %v1491 = vsel %vm477, %v1476, 0.0
    %1492 = vadd.xlane.f32.xlu0 %v1491
    %v1493 = vpop.xlane.xlu0 %1492
    %v1494 = vsel %vm477, %v1478, 0.0
    %1495 = vadd.xlane.f32.xlu0 %v1494
    %v1496 = vpop.xlane.xlu0 %1495
    %v1497 = vsel %vm477, %v1480, 0.0
    %1498 = vadd.xlane.f32.xlu0 %v1497
    %v1499 = vpop.xlane.xlu0 %1498
    %v1500 = vsel %vm477, %v1482, 0.0
    %1501 = vadd.xlane.f32.xlu0 %v1500
    %v1502 = vpop.xlane.xlu0 %1501
    %v1503 = vsel %vm477, %v1484, 0.0
    %1504 = vadd.xlane.f32.xlu0 %v1503
    %v1505 = vpop.xlane.xlu0 %1504
    %v1506 = vsel %vm477, %v1486, 0.0
    %1507 = vadd.xlane.f32.xlu0 %v1506
    %v1508 = vpop.xlane.xlu0 %1507
    %v1509 = vsel %vm477, %v1488, 0.0
    %1510 = vadd.xlane.f32.xlu0 %v1509
    %v1511 = vpop.xlane.xlu0 %1510
    %v1512 = vsel %vm477, %v1490, 0.0
    %1513 = vadd.xlane.f32.xlu0 %v1512
    %v1514 = vpop.xlane.xlu0 %1513
    %v1515 = vrcp.pop %v1493
    %v1516 = vrcp.pop %v1496
    %v1517 = vrcp.pop %v1499
    %v1518 = vrcp.pop %v1502
    %v1519 = vrcp.pop %v1505
    %v1520 = vrcp.pop %v1508
    %v1521 = vrcp.pop %v1511
    %v1522 = vrcp.pop %v1514
    %v1523 = vmul.f32 %v1476, %v1515
    %v1524 = vmul.f32 %v1478, %v1516
    %v1525 = vmul.f32 %v1480, %v1517
    %v1526 = vmul.f32 %v1482, %v1518
    %v1527 = vmul.f32 %v1484, %v1519
    %v1528 = vmul.f32 %v1486, %v1520
    %v1529 = vmul.f32 %v1488, %v1521
    %v1530 = vmul.f32 %v1490, %v1522
    %1531 = vrot.lane.b32.xlu0 %v1228, 112
    %v1532 = vpop.permute.xlu0 %1531
    %1533 = vrot.lane.b32.xlu0 %v1233, 112
    %v1534 = vpop.permute.xlu0 %1533
    %1535 = vrot.lane.b32.xlu0 %v1238, 112
    %v1536 = vpop.permute.xlu0 %1535
    %1537 = vrot.lane.b32.xlu0 %v1243, 112
    %v1538 = vpop.permute.xlu0 %1537
    %1539 = vrot.lane.b32.xlu0 %v1248, 112
    %v1540 = vpop.permute.xlu0 %1539
    %1541 = vrot.lane.b32.xlu0 %v1253, 112
    %v1542 = vpop.permute.xlu0 %1541
    %1543 = vrot.lane.b32.xlu0 %v1258, 112
    %v1544 = vpop.permute.xlu0 %1543
    %1545 = vrot.lane.b32.xlu0 %v1263, 112
    %v1546 = vpop.permute.xlu0 %1545
    %v1556 = vsel %vm477, %v1523, 0
    %v1559 = vsel %vm477, %v1524, 0
    %v1562 = vsel %vm477, %v1525, 0
    %v1565 = vsel %vm477, %v1526, 0
    %v1568 = vsel %vm477, %v1527, 0
    %v1571 = vsel %vm477, %v1528, 0
    %v1574 = vsel %vm477, %v1529, 0
    %v1577 = vsel %vm477, %v1530, 0
    %1579 = vmatprep.subr.mxu0 0.0
    %1580 = vmatpush1.msra.mxu0 %v1532
    %1581 = vmatprep.subr.mxu0 0.0
    %1582 = vmatpush1.msra.mxu0 %v1534
    %1583 = vmatprep.subr.mxu0 0.0
    %1584 = vmatpush1.msra.mxu0 %v1536
    %1585 = vmatprep.subr.mxu0 0.0
    %1586 = vmatpush1.msra.mxu0 %v1538
    %1587 = vmatprep.subr.mxu0 0.0
    %1588 = vmatpush1.msra.mxu0 %v1540
    %1589 = vmatprep.subr.mxu0 0.0
    %1590 = vmatpush1.msra.mxu0 %v1542
    %1591 = vmatprep.subr.mxu0 0.0
    %1592 = vmatpush1.msra.mxu0 %v1544
    %1593 = vmatprep.subr.mxu0 0.0
    %1594 = vmatpush1.msra.mxu0 %v1546
    %1595 = vmatprep.subr.mxu0 0.0
    %1596 = vmatpush1.msra.mxu0 0.0
    %1597 = vmatprep.subr.mxu0 0.0
    %1598 = vmatpush1.msra.mxu0 0.0
    %1599 = vmatprep.subr.mxu0 0.0
    %1600 = vmatpush1.msra.mxu0 0.0
    %1601 = vmatprep.subr.mxu0 0.0
    %1602 = vmatpush1.msra.mxu0 0.0
    %1603 = vmatprep.subr.mxu0 0.0
    %1604 = vmatpush1.msra.mxu0 0.0
    %1605 = vmatprep.subr.mxu0 0.0
    %1606 = vmatpush1.msra.mxu0 0.0
    %1607 = vmatprep.subr.mxu0 0.0
    %1608 = vmatpush1.msra.mxu0 0.0
    %1609 = vmatprep.subr.mxu0 0.0
    %1610 = vmatpush1.msra.mxu0 0.0
    %1611 = vmatprep.subr.mxu0 0.0
    %1612 = vmatpush1.msra.mxu0 0.0
    %1613 = vmatprep.subr.mxu0 0.0
    %1614 = vmatpush1.msra.mxu0 0.0
    %1615 = vmatprep.subr.mxu0 0.0
    %1616 = vmatpush1.msra.mxu0 0.0
    %1617 = vmatprep.subr.mxu0 0.0
    %1618 = vmatpush1.msra.mxu0 0.0
    %1619 = vmatprep.subr.mxu0 0.0
    %1620 = vmatpush1.msra.mxu0 0.0
    %1621 = vmatprep.subr.mxu0 0.0
    %1622 = vmatpush1.msra.mxu0 0.0
    %1623 = vmatprep.subr.mxu0 0.0
    %1624 = vmatpush1.msra.mxu0 0.0
    %1625 = vmatprep.subr.mxu0 0.0
    %1626 = vmatpush1.msra.mxu0 0.0
    %1627 = vmatprep.subr.mxu0 0.0
    %1628 = vmatpush1.msra.mxu0 0.0
    %1629 = vmatprep.subr.mxu0 0.0
    %1630 = vmatpush1.msra.mxu0 0.0
    %1631 = vmatprep.subr.mxu0 0.0
    %1632 = vmatpush1.msra.mxu0 0.0
    %1633 = vmatprep.subr.mxu0 0.0
    %1634 = vmatpush1.msra.mxu0 0.0
    %1635 = vmatprep.subr.mxu0 0.0
    %1636 = vmatpush1.msra.mxu0 0.0
    %1637 = vmatprep.subr.mxu0 0.0
    %1638 = vmatpush1.msra.mxu0 0.0
    %1639 = vmatprep.subr.mxu0 0.0
    %1640 = vmatpush1.msra.mxu0 0.0
    %1641 = vmatprep.subr.mxu0 0.0
    %1642 = vmatpush1.msra.mxu0 0.0
    %1643 = vmatprep.mubr.f32.mxu0 0.0
    %1644 = vmatmul.mubr.f32.gmra.mrb[0].mxu0 %v1556
    %v1645 = vpop.f32.mrb[0].mxu0
    %v1646 = vadd.f32 0.0, %v1645
    %v1647 = vpop.f32.mrb[0].mxu0
    %1648 = vmatprep.mubr.f32.mxu0 0.0
    %1649 = vmatmul.mubr.f32.gmra.mrb[0].mxu0 %v1559
    %v1650 = vpop.f32.mrb[0].mxu0
    %v1651 = vadd.f32 0.0, %v1650
    %v1652 = vpop.f32.mrb[0].mxu0
    %1653 = vmatprep.mubr.f32.mxu0 0.0
    %1654 = vmatmul.mubr.f32.gmra.mrb[0].mxu0 %v1562
    %v1655 = vpop.f32.mrb[0].mxu0
    %v1656 = vadd.f32 0.0, %v1655
    %v1657 = vpop.f32.mrb[0].mxu0
    %1658 = vmatprep.mubr.f32.mxu0 0.0
    %1659 = vmatmul.mubr.f32.gmra.mrb[0].mxu0 %v1565
    %v1660 = vpop.f32.mrb[0].mxu0
    %v1661 = vadd.f32 0.0, %v1660
    %v1662 = vpop.f32.mrb[0].mxu0
    %1663 = vmatprep.mubr.f32.mxu0 0.0
    %1664 = vmatmul.mubr.f32.gmra.mrb[0].mxu0 %v1568
    %v1665 = vpop.f32.mrb[0].mxu0
    %v1666 = vadd.f32 0.0, %v1665
    %v1667 = vpop.f32.mrb[0].mxu0
    %1668 = vmatprep.mubr.f32.mxu0 0.0
    %1669 = vmatmul.mubr.f32.gmra.mrb[0].mxu0 %v1571
    %v1670 = vpop.f32.mrb[0].mxu0
    %v1671 = vadd.f32 0.0, %v1670
    %v1672 = vpop.f32.mrb[0].mxu0
    %1673 = vmatprep.mubr.f32.mxu0 0.0
    %1674 = vmatmul.mubr.f32.gmra.mrb[0].mxu0 %v1574
    %v1675 = vpop.f32.mrb[0].mxu0
    %v1676 = vadd.f32 0.0, %v1675
    %v1677 = vpop.f32.mrb[0].mxu0
    %1678 = vmatprep.mubr.f32.mxu0 0.0
    %1679 = vmatmul.mubr.f32.gmra.mrb[0].mxu0 %v1577
    %v1680 = vpop.f32.mrb[0].mxu0
    %v1681 = vadd.f32 0.0, %v1680
    %v1682 = vpop.f32.mrb[0].mxu0
    %1683 = vdwg.mxu0
    %1686 = vrot.lane.b32.xlu0 %v1656, 8
    %v1687 = vpop.permute.xlu0 %1686
    %1688 = vrot.lane.b32.xlu0 %v1661, 8
    %v1689 = vpop.permute.xlu0 %1688
    %1694 = vrot.lane.b32.xlu0 %v1666, 16
    %v1695 = vpop.permute.xlu0 %1694
    %1696 = vrot.lane.b32.xlu0 %v1671, 16
    %v1697 = vpop.permute.xlu0 %1696
    %1702 = vrot.lane.b32.xlu0 %v1676, 24
    %v1703 = vpop.permute.xlu0 %1702
    %1704 = vrot.lane.b32.xlu0 %v1681, 24
    %v1705 = vpop.permute.xlu0 %1704
    %v1708 = vsel %vm178, %v1646, %v1687
    %v1709 = vsel %vm178, %v1651, %v1689
    %v1710 = vsel %vm745, %v1708, %v1695
    %v1711 = vsel %vm745, %v1709, %v1697
    %v1712 = vsel %vm748, %v1710, %v1703
    %v1713 = vsel %vm748, %v1711, %v1705
    %s1714 = scalar_lea.vmem %s6, 32
    %v1715 = vld [vmem:[%s1714] sm:$0xff]
    %v1716 = vld [vmem:[%s1714 + $0x8] sm:$0xff]
    %v1717 = vld [vmem:[%s1714 + $0x10] sm:$0xff]
    %v1718 = vld [vmem:[%s1714 + $0x18] sm:$0xff]
    %s1719 = scalar_lea.vmem %s7, 1
    %v1720 = vld [vmem:[%s1719] sm:$0x1]
    %v1722 = vlaneseq
    %v1723 = vshrl.u32 %v1722, 7
    %v1724 = vsub.s32 0, %v1723
    %v1725 = vrot.slane %v1720, %v1724
    %v1728 = vsel %vm762, %v1712, 0
    %v1731 = vsel %vm762, %v1713, 0
    %1733 = vmatprep.subr.mxu0 0.0
    %1734 = vmatpush1.msra.mxu0 %v1715
    %1735 = vmatprep.subr.mxu0 0.0
    %1736 = vmatpush1.msra.mxu0 %v1716
    %1737 = vmatprep.subr.mxu0 0.0
    %1738 = vmatpush1.msra.mxu0 %v1717
    %1739 = vmatprep.subr.mxu0 0.0
    %1740 = vmatpush1.msra.mxu0 %v1718
    %1741 = vmatprep.subr.mxu0 0.0
    %1742 = vmatpush1.msra.mxu0 0.0
    %1743 = vmatprep.subr.mxu0 0.0
    %1744 = vmatpush1.msra.mxu0 0.0
    %1745 = vmatprep.subr.mxu0 0.0
    %1746 = vmatpush1.msra.mxu0 0.0
    %1747 = vmatprep.subr.mxu0 0.0
    %1748 = vmatpush1.msra.mxu0 0.0
    %1749 = vmatprep.subr.mxu0 0.0
    %1750 = vmatpush1.msra.mxu0 0.0
    %1751 = vmatprep.subr.mxu0 0.0
    %1752 = vmatpush1.msra.mxu0 0.0
    %1753 = vmatprep.subr.mxu0 0.0
    %1754 = vmatpush1.msra.mxu0 0.0
    %1755 = vmatprep.subr.mxu0 0.0
    %1756 = vmatpush1.msra.mxu0 0.0
    %1757 = vmatprep.subr.mxu0 0.0
    %1758 = vmatpush1.msra.mxu0 0.0
    %1759 = vmatprep.subr.mxu0 0.0
    %1760 = vmatpush1.msra.mxu0 0.0
    %1761 = vmatprep.subr.mxu0 0.0
    %1762 = vmatpush1.msra.mxu0 0.0
    %1763 = vmatprep.subr.mxu0 0.0
    %1764 = vmatpush1.msra.mxu0 0.0
    %1765 = vmatprep.subr.mxu0 0.0
    %1766 = vmatpush1.msra.mxu0 0.0
    %1767 = vmatprep.subr.mxu0 0.0
    %1768 = vmatpush1.msra.mxu0 0.0
    %1769 = vmatprep.subr.mxu0 0.0
    %1770 = vmatpush1.msra.mxu0 0.0
    %1771 = vmatprep.subr.mxu0 0.0
    %1772 = vmatpush1.msra.mxu0 0.0
    %1773 = vmatprep.subr.mxu0 0.0
    %1774 = vmatpush1.msra.mxu0 0.0
    %1775 = vmatprep.subr.mxu0 0.0
    %1776 = vmatpush1.msra.mxu0 0.0
    %1777 = vmatprep.subr.mxu0 0.0
    %1778 = vmatpush1.msra.mxu0 0.0
    %1779 = vmatprep.subr.mxu0 0.0
    %1780 = vmatpush1.msra.mxu0 0.0
    %1781 = vmatprep.subr.mxu0 0.0
    %1782 = vmatpush1.msra.mxu0 0.0
    %1783 = vmatprep.subr.mxu0 0.0
    %1784 = vmatpush1.msra.mxu0 0.0
    %1785 = vmatprep.subr.mxu0 0.0
    %1786 = vmatpush1.msra.mxu0 0.0
    %1787 = vmatprep.subr.mxu0 0.0
    %1788 = vmatpush1.msra.mxu0 0.0
    %1789 = vmatprep.subr.mxu0 0.0
    %1790 = vmatpush1.msra.mxu0 0.0
    %1791 = vmatprep.subr.mxu0 0.0
    %1792 = vmatpush1.msra.mxu0 0.0
    %1793 = vmatprep.subr.mxu0 0.0
    %1794 = vmatpush1.msra.mxu0 0.0
    %1795 = vmatprep.subr.mxu0 0.0
    %1796 = vmatpush1.msra.mxu0 0.0
    %1797 = vmatprep.mubr.f32.mxu0 0.0
    %1798 = vmatmul.mubr.f32.gmra.mrb[0].mxu0 %v1728
    %v1799 = vpop.f32.mrb[0].mxu0
    %v1800 = vadd.f32 %v1725, %v1799
    %v1801 = vpop.f32.mrb[0].mxu0
    %1802 = vmatprep.mubr.f32.mxu0 0.0
    %1803 = vmatmul.mubr.f32.gmra.mrb[0].mxu0 %v1731
    %v1804 = vpop.f32.mrb[0].mxu0
    %v1805 = vadd.f32 %v1725, %v1804
    %v1806 = vpop.f32.mrb[0].mxu0
    %1807 = vdwg.mxu0
    %v1808 = vadd.f32 %v1800, %v1127
    %v1809 = vadd.f32 %v1805, %v1128
    %s1810 = scalar_lea.vmem %s8, 1
    %v1811 = vld [vmem:[%s1810] sm:$0x1]
    %s1812 = scalar_lea.vmem %s9, 1
    %v1813 = vld [vmem:[%s1812] sm:$0x1]
    %v1814 = vsel %vm762, %v1808, 0.0
    %1815 = vadd.xlane.f32.xlu0 %v1814
    %v1816 = vpop.xlane.xlu0 %1815
    %v1817 = vsel %vm762, %v1809, 0.0
    %1818 = vadd.xlane.f32.xlu0 %v1817
    %v1819 = vpop.xlane.xlu0 %1818
    %v1820 = vmul.f32 %v1816, %v854
    %v1821 = vmul.f32 %v1819, %v854
    %v1822 = vsub.f32 %v1808, %v1820
    %v1823 = vsub.f32 %v1809, %v1821
    %v1824 = vmul.f32 %v1822, %v1822
    %v1825 = vmul.f32 %v1823, %v1823
    %v1826 = vsel %vm762, %v1824, 0.0
    %1827 = vadd.xlane.f32.xlu0 %v1826
    %v1828 = vpop.xlane.xlu0 %1827
    %v1829 = vsel %vm762, %v1825, 0.0
    %1830 = vadd.xlane.f32.xlu0 %v1829
    %v1831 = vpop.xlane.xlu0 %1830
    %v1832 = vmul.f32 %v1828, %v854
    %v1833 = vmul.f32 %v1831, %v854
    %v1834 = vadd.f32 %v1832, 1e-05
    %v1835 = vadd.f32 %v1833, 1e-05
    %v1836 = vrsqrt.pop %v1834
    %v1837 = vrsqrt.pop %v1835
    %v1838 = vmul.f32 %v1822, %v1836
    %v1839 = vmul.f32 %v1823, %v1837
    %v1841 = vlaneseq
    %v1842 = vshrl.u32 %v1841, 7
    %v1843 = vsub.s32 0, %v1842
    %v1844 = vrot.slane %v1811, %v1843
    %v1846 = vmul.f32 %v1838, %v1844
    %v1847 = vmul.f32 %v1839, %v1844
    %v1849 = vlaneseq
    %v1850 = vshrl.u32 %v1849, 7
    %v1851 = vsub.s32 0, %v1850
    %v1852 = vrot.slane %v1813, %v1851
    %v1854 = vadd.f32 %v1846, %v1852
    %v1855 = vadd.f32 %v1847, %v1852
    %s1856 = scalar_lea.vmem %s10, 32
    %v1857 = vld [vmem:[%s1856] sm:$0xff]
    %v1858 = vld [vmem:[%s1856 + $0x8] sm:$0xff]
    %v1859 = vld [vmem:[%s1856 + $0x10] sm:$0xff]
    %v1860 = vld [vmem:[%s1856 + $0x18] sm:$0xff]
    %s1861 = scalar_lea.vmem %s11, 1
    %v1862 = vld [vmem:[%s1861] sm:$0x1]
    %v1864 = vlaneseq
    %v1865 = vshrl.u32 %v1864, 7
    %v1866 = vsub.s32 0, %v1865
    %v1867 = vrot.slane %v1862, %v1866
    %v1870 = vsel %vm762, %v1854, 0
    %v1873 = vsel %vm762, %v1855, 0
    %1875 = vmatprep.subr.mxu0 0.0
    %1876 = vmatpush1.msra.mxu0 %v1857
    %1877 = vmatprep.subr.mxu0 0.0
    %1878 = vmatpush1.msra.mxu0 %v1858
    %1879 = vmatprep.subr.mxu0 0.0
    %1880 = vmatpush1.msra.mxu0 %v1859
    %1881 = vmatprep.subr.mxu0 0.0
    %1882 = vmatpush1.msra.mxu0 %v1860
    %1883 = vmatprep.subr.mxu0 0.0
    %1884 = vmatpush1.msra.mxu0 0.0
    %1885 = vmatprep.subr.mxu0 0.0
    %1886 = vmatpush1.msra.mxu0 0.0
    %1887 = vmatprep.subr.mxu0 0.0
    %1888 = vmatpush1.msra.mxu0 0.0
    %1889 = vmatprep.subr.mxu0 0.0
    %1890 = vmatpush1.msra.mxu0 0.0
    %1891 = vmatprep.subr.mxu0 0.0
    %1892 = vmatpush1.msra.mxu0 0.0
    %1893 = vmatprep.subr.mxu0 0.0
    %1894 = vmatpush1.msra.mxu0 0.0
    %1895 = vmatprep.subr.mxu0 0.0
    %1896 = vmatpush1.msra.mxu0 0.0
    %1897 = vmatprep.subr.mxu0 0.0
    %1898 = vmatpush1.msra.mxu0 0.0
    %1899 = vmatprep.subr.mxu0 0.0
    %1900 = vmatpush1.msra.mxu0 0.0
    %1901 = vmatprep.subr.mxu0 0.0
    %1902 = vmatpush1.msra.mxu0 0.0
    %1903 = vmatprep.subr.mxu0 0.0
    %1904 = vmatpush1.msra.mxu0 0.0
    %1905 = vmatprep.subr.mxu0 0.0
    %1906 = vmatpush1.msra.mxu0 0.0
    %1907 = vmatprep.subr.mxu0 0.0
    %1908 = vmatpush1.msra.mxu0 0.0
    %1909 = vmatprep.subr.mxu0 0.0
    %1910 = vmatpush1.msra.mxu0 0.0
    %1911 = vmatprep.subr.mxu0 0.0
    %1912 = vmatpush1.msra.mxu0 0.0
    %1913 = vmatprep.subr.mxu0 0.0
    %1914 = vmatpush1.msra.mxu0 0.0
    %1915 = vmatprep.subr.mxu0 0.0
    %1916 = vmatpush1.msra.mxu0 0.0
    %1917 = vmatprep.subr.mxu0 0.0
    %1918 = vmatpush1.msra.mxu0 0.0
    %1919 = vmatprep.subr.mxu0 0.0
    %1920 = vmatpush1.msra.mxu0 0.0
    %1921 = vmatprep.subr.mxu0 0.0
    %1922 = vmatpush1.msra.mxu0 0.0
    %1923 = vmatprep.subr.mxu0 0.0
    %1924 = vmatpush1.msra.mxu0 0.0
    %1925 = vmatprep.subr.mxu0 0.0
    %1926 = vmatpush1.msra.mxu0 0.0
    %1927 = vmatprep.subr.mxu0 0.0
    %1928 = vmatpush1.msra.mxu0 0.0
    %1929 = vmatprep.subr.mxu0 0.0
    %1930 = vmatpush1.msra.mxu0 0.0
    %1931 = vmatprep.subr.mxu0 0.0
    %1932 = vmatpush1.msra.mxu0 0.0
    %1933 = vmatprep.subr.mxu0 0.0
    %1934 = vmatpush1.msra.mxu0 0.0
    %1935 = vmatprep.subr.mxu0 0.0
    %1936 = vmatpush1.msra.mxu0 0.0
    %1937 = vmatprep.subr.mxu0 0.0
    %1938 = vmatpush1.msra.mxu0 0.0
    %1939 = vmatprep.mubr.f32.mxu0 0.0
    %1940 = vmatmul.mubr.f32.gmra.mrb[0].mxu0 %v1870
    %v1941 = vpop.f32.mrb[0].mxu0
    %v1942 = vadd.f32 %v1867, %v1941
    %v1943 = vpop.f32.mrb[0].mxu0
    %1944 = vmatprep.mubr.f32.mxu0 0.0
    %1945 = vmatmul.mubr.f32.gmra.mrb[0].mxu0 %v1873
    %v1946 = vpop.f32.mrb[0].mxu0
    %v1947 = vadd.f32 %v1867, %v1946
    %v1948 = vpop.f32.mrb[0].mxu0
    %1949 = vdwg.mxu0
    %v1950 = vmax.f32 %v1942, 0.0
    %v1951 = vmax.f32 %v1947, 0.0
    %s1952 = scalar_lea.vmem %s12, 128
    %v1953 = vld [vmem:[%s1952] sm:$0xff]
    %v1954 = vld [vmem:[%s1952 + $0x8] sm:$0xff]
    %v1955 = vld [vmem:[%s1952 + $0x10] sm:$0xff]
    %v1956 = vld [vmem:[%s1952 + $0x18] sm:$0xff]
    %v1957 = vld [vmem:[%s1952 + $0x20] sm:$0xff]
    %v1958 = vld [vmem:[%s1952 + $0x28] sm:$0xff]
    %v1959 = vld [vmem:[%s1952 + $0x30] sm:$0xff]
    %v1960 = vld [vmem:[%s1952 + $0x38] sm:$0xff]
    %v1961 = vld [vmem:[%s1952 + $0x40] sm:$0xff]
    %v1962 = vld [vmem:[%s1952 + $0x48] sm:$0xff]
    %v1963 = vld [vmem:[%s1952 + $0x50] sm:$0xff]
    %v1964 = vld [vmem:[%s1952 + $0x58] sm:$0xff]
    %v1965 = vld [vmem:[%s1952 + $0x60] sm:$0xff]
    %v1966 = vld [vmem:[%s1952 + $0x68] sm:$0xff]
    %v1967 = vld [vmem:[%s1952 + $0x70] sm:$0xff]
    %v1968 = vld [vmem:[%s1952 + $0x78] sm:$0xff]
    %s1969 = scalar_lea.vmem %s13, 1
    %v1970 = vld [vmem:[%s1969] sm:$0x1]
    %v1972 = vlaneseq
    %v1973 = vshrl.u32 %v1972, 7
    %v1974 = vsub.s32 0, %v1973
    %v1975 = vrot.slane %v1970, %v1974
    %1977 = vmatprep.subr.mxu0 0.0
    %1978 = vmatpush1.msra.mxu0 %v1953
    %1979 = vmatprep.subr.mxu0 0.0
    %1980 = vmatpush1.msra.mxu0 %v1954
    %1981 = vmatprep.subr.mxu0 0.0
    %1982 = vmatpush1.msra.mxu0 %v1955
    %1983 = vmatprep.subr.mxu0 0.0
    %1984 = vmatpush1.msra.mxu0 %v1956
    %1985 = vmatprep.subr.mxu0 0.0
    %1986 = vmatpush1.msra.mxu0 %v1957
    %1987 = vmatprep.subr.mxu0 0.0
    %1988 = vmatpush1.msra.mxu0 %v1958
    %1989 = vmatprep.subr.mxu0 0.0
    %1990 = vmatpush1.msra.mxu0 %v1959
    %1991 = vmatprep.subr.mxu0 0.0
    %1992 = vmatpush1.msra.mxu0 %v1960
    %1993 = vmatprep.subr.mxu0 0.0
    %1994 = vmatpush1.msra.mxu0 %v1961
    %1995 = vmatprep.subr.mxu0 0.0
    %1996 = vmatpush1.msra.mxu0 %v1962
    %1997 = vmatprep.subr.mxu0 0.0
    %1998 = vmatpush1.msra.mxu0 %v1963
    %1999 = vmatprep.subr.mxu0 0.0
    %2000 = vmatpush1.msra.mxu0 %v1964
    %2001 = vmatprep.subr.mxu0 0.0
    %2002 = vmatpush1.msra.mxu0 %v1965
    %2003 = vmatprep.subr.mxu0 0.0
    %2004 = vmatpush1.msra.mxu0 %v1966
    %2005 = vmatprep.subr.mxu0 0.0
    %2006 = vmatpush1.msra.mxu0 %v1967
    %2007 = vmatprep.subr.mxu0 0.0
    %2008 = vmatpush1.msra.mxu0 %v1968
    %2009 = vmatprep.subr.mxu0 0.0
    %2010 = vmatpush1.msra.mxu0 0.0
    %2011 = vmatprep.subr.mxu0 0.0
    %2012 = vmatpush1.msra.mxu0 0.0
    %2013 = vmatprep.subr.mxu0 0.0
    %2014 = vmatpush1.msra.mxu0 0.0
    %2015 = vmatprep.subr.mxu0 0.0
    %2016 = vmatpush1.msra.mxu0 0.0
    %2017 = vmatprep.subr.mxu0 0.0
    %2018 = vmatpush1.msra.mxu0 0.0
    %2019 = vmatprep.subr.mxu0 0.0
    %2020 = vmatpush1.msra.mxu0 0.0
    %2021 = vmatprep.subr.mxu0 0.0
    %2022 = vmatpush1.msra.mxu0 0.0
    %2023 = vmatprep.subr.mxu0 0.0
    %2024 = vmatpush1.msra.mxu0 0.0
    %2025 = vmatprep.subr.mxu0 0.0
    %2026 = vmatpush1.msra.mxu0 0.0
    %2027 = vmatprep.subr.mxu0 0.0
    %2028 = vmatpush1.msra.mxu0 0.0
    %2029 = vmatprep.subr.mxu0 0.0
    %2030 = vmatpush1.msra.mxu0 0.0
    %2031 = vmatprep.subr.mxu0 0.0
    %2032 = vmatpush1.msra.mxu0 0.0
    %2033 = vmatprep.subr.mxu0 0.0
    %2034 = vmatpush1.msra.mxu0 0.0
    %2035 = vmatprep.subr.mxu0 0.0
    %2036 = vmatpush1.msra.mxu0 0.0
    %2037 = vmatprep.subr.mxu0 0.0
    %2038 = vmatpush1.msra.mxu0 0.0
    %2039 = vmatprep.subr.mxu0 0.0
    %2040 = vmatpush1.msra.mxu0 0.0
    %2041 = vmatprep.mubr.f32.mxu0 0.0
    %2042 = vmatmul.mubr.f32.gmra.mrb[0].mxu0 %v1950
    %v2043 = vpop.f32.mrb[0].mxu0
    %v2044 = vadd.f32 %v1975, %v2043
    %v2045 = vpop.f32.mrb[0].mxu0
    %2046 = vmatprep.mubr.f32.mxu0 0.0
    %2047 = vmatmul.mubr.f32.gmra.mrb[0].mxu0 %v1951
    %v2048 = vpop.f32.mrb[0].mxu0
    %v2049 = vadd.f32 %v1975, %v2048
    %v2050 = vpop.f32.mrb[0].mxu0
    %2051 = vdwg.mxu0
    %v2052 = vadd.f32 %v2044, %v1854
    %v2053 = vadd.f32 %v2049, %v1855
    %s2054 = scalar_lea.vmem %s14, 1
    %v2055 = vld [vmem:[%s2054] sm:$0x1]
    %s2056 = scalar_lea.vmem %s15, 1
    %v2057 = vld [vmem:[%s2056] sm:$0x1]
    %v2058 = vsel %vm762, %v2052, 0.0
    %2059 = vadd.xlane.f32.xlu0 %v2058
    %v2060 = vpop.xlane.xlu0 %2059
    %v2061 = vsel %vm762, %v2053, 0.0
    %2062 = vadd.xlane.f32.xlu0 %v2061
    %v2063 = vpop.xlane.xlu0 %2062
    %v2064 = vmul.f32 %v2060, %v854
    %v2065 = vmul.f32 %v2063, %v854
    %v2066 = vsub.f32 %v2052, %v2064
    %v2067 = vsub.f32 %v2053, %v2065
    %v2068 = vmul.f32 %v2066, %v2066
    %v2069 = vmul.f32 %v2067, %v2067
    %v2070 = vsel %vm762, %v2068, 0.0
    %2071 = vadd.xlane.f32.xlu0 %v2070
    %v2072 = vpop.xlane.xlu0 %2071
    %v2073 = vsel %vm762, %v2069, 0.0
    %2074 = vadd.xlane.f32.xlu0 %v2073
    %v2075 = vpop.xlane.xlu0 %2074
    %v2076 = vmul.f32 %v2072, %v854
    %v2077 = vmul.f32 %v2075, %v854
    %v2078 = vadd.f32 %v2076, 1e-05
    %v2079 = vadd.f32 %v2077, 1e-05
    %v2080 = vrsqrt.pop %v2078
    %v2081 = vrsqrt.pop %v2079
    %v2082 = vmul.f32 %v2066, %v2080
    %v2083 = vmul.f32 %v2067, %v2081
    %v2085 = vlaneseq
    %v2086 = vshrl.u32 %v2085, 7
    %v2087 = vsub.s32 0, %v2086
    %v2088 = vrot.slane %v2055, %v2087
    %v2090 = vmul.f32 %v2082, %v2088
    %v2091 = vmul.f32 %v2083, %v2088
    %v2093 = vlaneseq
    %v2094 = vshrl.u32 %v2093, 7
    %v2095 = vsub.s32 0, %v2094
    %v2096 = vrot.slane %v2057, %v2095
    %v2098 = vadd.f32 %v2090, %v2096
    %v2099 = vadd.f32 %v2091, %v2096
    %2100 = vst.msk [vmem:[#allocation2] sm:$0xff] %vm762, %v2098
    %2101 = vst.msk [vmem:[#allocation2 + $0x8] sm:$0xff] %vm762, %v2099
    // Predicated region
    $region66: #{encoder_forward.1} parent=1 // pred_check
      _
    $region67: #{encoder_forward.1} parent=1 // pred_check_branch
      %2103 = sbr.rel (0) target = $region69
    $region68: #{encoder_forward.1} parent=1 // pred_region
      %s2105 = ssub.s32 256, 256
      %2106 = vsyncadd [#allocation3], %s2105
      %s2107 = sshll.u32 [#allocation2], 4
      %s2108 = int_to_ptr.vmem [resolvable:$true] %s2107
      %2113 = dma.vmem_to_hbm [thread:$0]  %s2108, 256, %s16, [#allocation3], 128, 128, 8
    $region69: #{encoder_forward.1} parent=1 // pred_fallthru
      _
    // Predicated region
    $region70: #{encoder_forward.1} parent=1 // pred_check
      _
    $region71: #{encoder_forward.1} parent=1 // pred_check_branch
      %2115 = sbr.rel (0) target = $region73
    $region72: #{encoder_forward.1} parent=1 // pred_region
      %2116 = dma.done [#allocation3], 256
    $region73: #{encoder_forward.1} parent=1 // pred_fallthru
      _
    %2117 = vsyncpa [#allocation3], 1

</llo_original>
